<compile_context>
chip_gen: v6e
topology: v6e:2x2x1
jax: 0.10.0
libtpu: 0.0.40
codegen_flags: <defaults>
</compile_context>

<pallas_src>
import functools

import jax
import jax.numpy as jnp
from jax import lax
from jax.experimental import pallas as pl
from jax.experimental.pallas import tpu as pltpu


def _per_sample_layernorm(v, gamma, beta, block_b, T, out_dtype, eps=1e-5):
    """LayerNorm over each sample's (BC, T) block of a (BC, block_b*T) slab.

    Two-pass centered statistics (matches nn.LayerNorm / the reference and
    avoids catastrophic cancellation).  Slices are lane-tile aligned
    (T % 128 == 0), and the unrolled loop only carries per-sample scalars
    plus the normalized slice, so vreg live ranges stay bounded.
    """
    parts = []
    for g in range(block_b):
        sl = v[:, g * T:(g + 1) * T]
        m = jnp.mean(sl)
        c = sl - m
        var = jnp.mean(c * c)
        r = lax.rsqrt(var + eps)
        parts.append((c * r * gamma + beta).astype(out_dtype))
    return jnp.concatenate(parts, axis=1) if block_b > 1 else parts[0]


def temporal_block_kernel(
    x_ref,    # (C, Nb)      Nb = block_b*T, sample-major columns
    wp_ref,   # (BC, C)      pointconv weight (k=1 conv == matmul)
    bp_ref,   # (BC, 1)      pointconv bias
    a1_ref,   # (BC, 1)      PReLU(block_chan) alphas
    g1_ref,   # (BC, T)      LayerNorm 1 weight
    be1_ref,  # (BC, T)      LayerNorm 1 bias
    w3_ref,   # (BC, 3*BC)   k=3 conv weights, taps concatenated [W0|W1|W2]
    b3_ref,   # (BC, 1)      k=3 conv bias
    a2_ref,   # (1,) SMEM    scalar PReLU alpha
    g2_ref,   # (BC, T)      LayerNorm 2 weight
    be2_ref,  # (BC, T)      LayerNorm 2 bias
    wo_ref,   # (C, BC)      final 1x1 conv weight
    bo_ref,   # (C, 1)       final 1x1 conv bias
    out_ref,  # (C, Nb)
    *, dilation: int, block_b: int, t_len: int,
):
    d = dilation
    T = t_len
    Nb = x_ref.shape[-1]

    x_in = x_ref[...]
    x_f32 = x_in.astype(jnp.float32)

    wp = wp_ref[...]
    bp = bp_ref[...]
    a1 = a1_ref[...]
    g1 = g1_ref[...]
    be1 = be1_ref[...]
    w3 = w3_ref[...]
    b3 = b3_ref[...]
    a2 = a2_ref[0]                      # scalar from SMEM (scalar path)
    g2 = g2_ref[...]
    be2 = be2_ref[...]
    wo = wo_ref[...]
    bo = bo_ref[...]
    cdt = wp.dtype                      # matmul-operand dtype

    # Per-sample column index and dilated-tap edge masks, hoisted once per
    # grid step ((1, Nb) rows, broadcast across channels in the selects).
    col = lax.broadcasted_iota(jnp.int32, (1, Nb), 1) % T
    mask_l = col >= d
    mask_r = col < (T - d)

    # --- pointconv (Conv1d k=1) + per-channel PReLU + LayerNorm 1 -----------
    y = jnp.dot(wp, x_in.astype(cdt), preferred_element_type=jnp.float32) + bp
    y = jnp.where(y > 0, y, a1 * y)
    y1 = _per_sample_layernorm(y, g1, be1, block_b, T, cdt)       # (BC,Nb) cdt

    # --- Conv1d k=3, dilation=d, padding=d  ->  one K=3*BC MXU matmul -------
    # out[:, t] = W0 @ y[:, t-d] + W1 @ y[:, t] + W2 @ y[:, t+d]
    # Rolls are over the whole slab; the per-sample masks zero any column
    # that would otherwise read across a sample boundary (== zero padding).
    zero = jnp.zeros((), cdt)
    y_l = jnp.where(mask_l, pltpu.roll(y1, shift=d, axis=1), zero)
    y_r = jnp.where(mask_r, pltpu.roll(y1, shift=Nb - d, axis=1), zero)
    y_stack = jnp.concatenate([y_l, y1, y_r], axis=0)             # (3BC,Nb)
    z = jnp.dot(w3, y_stack, preferred_element_type=jnp.float32) + b3

    # --- scalar PReLU + LayerNorm 2 ------------------------------------------
    z = jnp.where(z > 0, z, a2 * z)
    z1 = _per_sample_layernorm(z, g2, be2, block_b, T, cdt)       # (BC,Nb) cdt

    # --- final 1x1 conv + residual --------------------------------------------
    o = jnp.dot(wo, z1, preferred_element_type=jnp.float32) + bo
    out_ref[...] = (o + x_f32).astype(out_ref.dtype)


@functools.lru_cache(maxsize=1)
def _single_buffer_params_supported():
    """Probe once whether BlockSpec(pipeline_mode=pl.Buffered(1)) is usable."""
    if not hasattr(pl, "Buffered"):
        return False
    try:
        def k(a_ref, o_ref):
            o_ref[...] = a_ref[...]

        a = jnp.arange(8 * 128, dtype=jnp.float32).reshape(8, 128)
        fn = pl.pallas_call(
            k,
            out_shape=jax.ShapeDtypeStruct((16, 128), jnp.float32),
            grid_spec=pltpu.PrefetchScalarGridSpec(
                num_scalar_prefetch=0,
                grid=(2,),
                in_specs=[pl.BlockSpec((8, 128), lambda i: (0, 0),
                                       pipeline_mode=pl.Buffered(1))],
                out_specs=pl.BlockSpec((8, 128), lambda i: (i, 0)),
            ),
        )
        out = jax.block_until_ready(fn(a))
        return bool(jnp.allclose(out, jnp.tile(a, (2, 1))))
    except Exception:
        return False


def _vmem_capacity_bytes():
    try:
        info = pltpu.get_tpu_info()
        cap = int(getattr(info, "vmem_capacity_bytes", 0))
        if cap > 0:
            return cap
    except Exception:
        pass
    return 64 * 1024 * 1024     # conservative default (v7x per-core VMEM)


def _choose_block_b(B, C, BC, T, x_bytes, cdt_bytes, budget_bytes, cap=8):
    """Largest divisor of B (capped) whose per-step footprint fits the VMEM
    budget, preferring configurations with >= 2 grid programs so both v7x
    TensorCores get work under dimension_semantics=('parallel',)."""
    feasible = [1]
    for bb in range(2, min(B, cap) + 1):
        if B % bb:
            continue
        nb = bb * T
        io = 2 * 2 * C * nb * x_bytes                               # in+out, 2 bufs
        tmp = nb * (BC * (2 * 4 + 5 * cdt_bytes) + 2 * C * 4)       # in-kernel temps
        if io + tmp <= budget_bytes:
            feasible.append(bb)
    multi = [bb for bb in feasible if B // bb >= 2]
    return max(multi) if multi else max(feasible)


def temporal_block(x, params, dilation=1, block_b=None,
                   compute_dtype=jnp.bfloat16):
    """Fused TemporalBlock forward.  x: (B, C, T).

    compute_dtype: matmul-operand dtype.  bf16 (default) is MXU-native on
    v6e/v7x; use jnp.float32 on v5e where the contraction dims are tiny and
    the extra casts are pure VALU overhead.
    """
    B, C, T = x.shape
    BC = params["w_point"].shape[0]
    if not (0 < dilation < T):
        raise ValueError("dilation must satisfy 0 < d < T (no wrap-around)")
    if T % 128 != 0:
        # TODO(synk): support ragged T via padding + masked LayerNorm stats.
        raise ValueError("T must be a multiple of 128 (pad in the caller): "
                         "non-multiples degrade the final store to masked "
                         "vst and would corrupt whole-slab LayerNorm stats.")
    if C % 8 or BC % 8:
        raise ValueError("chan and block_chan must be multiples of 8.")

    cdt = jnp.dtype(compute_dtype)

    # Pre-concatenate the three k=3 taps once: (BC, 3*BC) = [W0 | W1 | W2].
    w3 = params["w_conv1"]                       # (3, BC, BC), w3[k] = W[:, :, k]
    w3cat = jnp.concatenate([w3[0], w3[1], w3[2]], axis=1)

    ops = (
        params["w_point"].astype(cdt),
        params["b_point"],
        params["alpha1"],
        params["g1"], params["beta1"],
        w3cat.astype(cdt),
        params["b_conv1"],
        params["alpha2"].reshape((1,)).astype(jnp.float32),     # -> SMEM scalar
        params["g2"], params["beta2"],
        params["w_conv2"].astype(cdt),
        params["b_conv2"],
    )
    a2_idx = 7

    single_buf = _single_buffer_params_supported()
    param_bufs = 1 if single_buf else 2
    params_bytes = sum(int(a.size) * a.dtype.itemsize for a in ops) * param_bufs

    vmem_cap = _vmem_capacity_bytes()
    vmem_limit = int(min(int(vmem_cap * 0.85), 112 * 1024 * 1024))
    budget = vmem_limit - params_bytes - (2 << 20)

    if block_b is None:
        block_b = _choose_block_b(B, C, BC, T, x.dtype.itemsize,
                                  cdt.itemsize, budget)
    if B % block_b:
        raise ValueError("block_b must divide the batch size")
    grid_b = B // block_b
    Nb = block_b * T

    # Sample-major column layout: grid step b sees a lane-dense (C, block_b*T)
    # slab so every matmul runs with N = block_b*T MXU columns (layout
    # plumbing only; reversed after the call).
    x2 = (x.reshape(grid_b, block_b, C, T)
           .transpose(0, 2, 1, 3)
           .reshape(grid_b, C, Nb))

    def const_spec(a):
        nd = a.ndim
        kwargs = {"pipeline_mode": pl.Buffered(1)} if single_buf else {}
        return pl.BlockSpec(a.shape, lambda b, _nd=nd: (0,) * _nd, **kwargs)

    in_specs = [pl.BlockSpec((None, C, Nb), lambda b: (b, 0, 0))]
    for i, a in enumerate(ops):
        if i == a2_idx:
            in_specs.append(pl.BlockSpec(memory_space=pltpu.MemorySpace.SMEM))
        else:
            in_specs.append(const_spec(a))
    out_spec = pl.BlockSpec((None, C, Nb), lambda b: (b, 0, 0))

    kernel = functools.partial(temporal_block_kernel, dilation=dilation,
                               block_b=block_b, t_len=T)
    out2 = pl.pallas_call(
        kernel,
        out_shape=jax.ShapeDtypeStruct((grid_b, C, Nb), x.dtype),
        grid_spec=pltpu.PrefetchScalarGridSpec(
            num_scalar_prefetch=0,
            grid=(grid_b,),
            in_specs=in_specs,
            out_specs=out_spec,
        ),
        compiler_params=pltpu.CompilerParams(
            dimension_semantics=("parallel",),
            vmem_limit_bytes=vmem_limit,
        ),
    )(x2, *ops)

    return (out2.reshape(grid_b, C, block_b, T)
                .transpose(0, 2, 1, 3)
                .reshape(B, C, T))


def temporal_block_ref(x, p, dilation=1):
    """Pure-JAX reference mirroring the PyTorch module semantics (f32)."""
    d = dilation

    def prelu(v, a):
        return jnp.where(v > 0, v, a * v)

    def ln(v, g, b, eps=1e-5):
        m = jnp.mean(v, axis=(-2, -1), keepdims=True)
        var = jnp.mean((v - m) ** 2, axis=(-2, -1), keepdims=True)
        return (v - m) * lax.rsqrt(var + eps) * g + b

    y = jnp.einsum("oc,bct->bot", p["w_point"], x) + p["b_point"]
    y = prelu(y, p["alpha1"])
    y = ln(y, p["g1"], p["beta1"])
    w1 = jnp.transpose(p["w_conv1"], (1, 2, 0))       # (O, I, K)
    z = lax.conv_general_dilated(
        y, w1, window_strides=(1,), padding=[(d, d)], rhs_dilation=(d,),
        dimension_numbers=("NCH", "OIH", "NCH"))
    z = z + p["b_conv1"]
    z = prelu(z, p["alpha2"][0, 0])
    z = ln(z, p["g2"], p["beta2"])
    o = jnp.einsum("oc,bct->bot", p["w_conv2"], z) + p["b_conv2"]
    return o + x


def make_params(key, C, BC, T):
    ks = jax.random.split(key, 10)
    f32 = jnp.float32
    return {
        "w_point": (jax.random.normal(ks[0], (BC, C), f32) / jnp.sqrt(C)),
        "b_point": 0.1 * jax.random.normal(ks[1], (BC, 1), f32),
        "alpha1": jnp.full((BC, 1), 0.25, f32),          # PReLU(BC) default init
        "g1": 1.0 + 0.1 * jax.random.normal(ks[2], (BC, T), f32),
        "beta1": 0.1 * jax.random.normal(ks[3], (BC, T), f32),
        "w_conv1": (jax.random.normal(ks[4], (3, BC, BC), f32)
                    / jnp.sqrt(3.0 * BC)),
        "b_conv1": 0.1 * jax.random.normal(ks[5], (BC, 1), f32),
        "alpha2": jnp.full((1, 1), 0.25, f32),           # PReLU() default init
        "g2": 1.0 + 0.1 * jax.random.normal(ks[6], (BC, T), f32),
        "beta2": 0.1 * jax.random.normal(ks[7], (BC, T), f32),
        "w_conv2": (jax.random.normal(ks[8], (C, BC), f32) / jnp.sqrt(BC)),
        "b_conv2": 0.1 * jax.random.normal(ks[9], (C, 1), f32),
    }


if __name__ == "__main__":
    # Small shapes: batch=4, chan=8, block_chan=16, T=128, dilation=2.
    # B=4 exercises the batched-matmul path (block_b=2 -> N=256 lanes, 2 grid
    # programs) while keeping the reference check cheap.
    B, C, BC, T, DIL = 4, 8, 16, 128, 2

    key = jax.random.PRNGKey(0)
    kx, kp = jax.random.split(key)
    x = jax.random.normal(kx, (B, C, T), jnp.float32)
    params = make_params(kp, C, BC, T)

    ref = temporal_block_ref(x, params, dilation=DIL)

    # f32 matmul path: tight check against the reference.
    out_f32 = jax.block_until_ready(
        temporal_block(x, params, dilation=DIL, compute_dtype=jnp.float32))
    if not bool(jnp.allclose(out_f32, ref, atol=1e-4, rtol=1e-4)):
        raise AssertionError("f32 Pallas kernel output does not match reference")

    # bf16-operand / f32-accumulate path (MXU-native on v6e/v7x): loose check.
    out_bf16 = jax.block_until_ready(
        temporal_block(x, params, dilation=DIL, compute_dtype=jnp.bfloat16))
    if not bool(jnp.allclose(out_bf16, ref, atol=5e-2, rtol=5e-2)):
        raise AssertionError("bf16 Pallas kernel output does not match reference")

    print("KERNEL_OK")
</pallas_src>

<mosaic_0001>
module attributes {stable_mosaic.version = 11 : i64} {
  func.func @k(%arg0: i32, %arg1: memref<8x128xf32, #tpu.memory_space<vmem>>, %arg2: memref<8x128xf32, #tpu.memory_space<vmem>>) attributes {dimension_semantics = [#tpu.dimension_semantics<arbitrary>], iteration_bounds = array<i64: 2>, scalar_prefetch = 0 : i64, scratch_operands = 0 : i64, tpu.core_type = #tpu.core_type<tc>, window_params = [{pipeline_mode = #tpu.pipeline_mode<synchronous>, transform_indices = @transform_0, window_bounds = array<i64: 8, 128>}, {transform_indices = @transform_1, window_bounds = array<i64: 8, 128>}]} {
    %c0 = arith.constant 0 : index
    %c0_0 = arith.constant 0 : index
    %0 = vector.load %arg1[%c0, %c0_0] : memref<8x128xf32, #tpu.memory_space<vmem>>, vector<8x128xf32>
    %c0_1 = arith.constant 0 : index
    %c0_2 = arith.constant 0 : index
    %1 = vector.load %arg2[%c0_1, %c0_2] : memref<8x128xf32, #tpu.memory_space<vmem>>, vector<8x128xf32>
    tpu.vector_store %arg2[%c0_1, %c0_2], %0 {strides = array<i32>} : memref<8x128xf32, #tpu.memory_space<vmem>>, vector<8x128xf32>,
    return
  }
  func.func @transform_0(%arg0: i32) -> (i32, i32) {
    %c0_i32 = arith.constant 0 : i32
    %c0_i32_0 = arith.constant 0 : i32
    %c0_i32_1 = arith.constant 0 : i32
    return %c0_i32, %c0_i32_0 : i32, i32
  }
  func.func @transform_1(%arg0: i32) -> (i32, i32) {
    %c0_i32 = arith.constant 0 : i32
    %c0_i32_0 = arith.constant 0 : i32
    return %arg0, %c0_i32 : i32, i32
  }
}

module attributes {stable_mosaic.version = 11 : i64} {
  func.func @temporal_block_kernel(%arg0: i32, %arg1: memref<1x8x256xf32, #tpu.memory_space<vmem>>, %arg2: memref<16x8xf32, #tpu.memory_space<vmem>>, %arg3: memref<16x1xf32, #tpu.memory_space<vmem>>, %arg4: memref<16x1xf32, #tpu.memory_space<vmem>>, %arg5: memref<16x128xf32, #tpu.memory_space<vmem>>, %arg6: memref<16x128xf32, #tpu.memory_space<vmem>>, %arg7: memref<16x48xf32, #tpu.memory_space<vmem>>, %arg8: memref<16x1xf32, #tpu.memory_space<vmem>>, %arg9: memref<1xf32, #tpu.memory_space<smem>>, %arg10: memref<16x128xf32, #tpu.memory_space<vmem>>, %arg11: memref<16x128xf32, #tpu.memory_space<vmem>>, %arg12: memref<8x16xf32, #tpu.memory_space<vmem>>, %arg13: memref<8x1xf32, #tpu.memory_space<vmem>>, %arg14: memref<1x8x256xf32, #tpu.memory_space<vmem>>) attributes {dimension_semantics = [#tpu.dimension_semantics<parallel>], iteration_bounds = array<i64: 2>, scalar_prefetch = 0 : i64, scratch_operands = 0 : i64, tpu.core_type = #tpu.core_type<tc>, window_params = [{transform_indices = @transform_0, window_bounds = array<i64: 1, 8, 256>}, {pipeline_mode = #tpu.pipeline_mode<synchronous>, transform_indices = @transform_1, window_bounds = array<i64: 16, 8>}, {pipeline_mode = #tpu.pipeline_mode<synchronous>, transform_indices = @transform_2, window_bounds = array<i64: 16, 1>}, {pipeline_mode = #tpu.pipeline_mode<synchronous>, transform_indices = @transform_3, window_bounds = array<i64: 16, 1>}, {pipeline_mode = #tpu.pipeline_mode<synchronous>, transform_indices = @transform_4, window_bounds = array<i64: 16, 128>}, {pipeline_mode = #tpu.pipeline_mode<synchronous>, transform_indices = @transform_5, window_bounds = array<i64: 16, 128>}, {pipeline_mode = #tpu.pipeline_mode<synchronous>, transform_indices = @transform_6, window_bounds = array<i64: 16, 48>}, {pipeline_mode = #tpu.pipeline_mode<synchronous>, transform_indices = @transform_7, window_bounds = array<i64: 16, 1>}, {transform_indices = @transform_8, window_bounds = array<i64: 1>}, {pipeline_mode = #tpu.pipeline_mode<synchronous>, transform_indices = @transform_9, window_bounds = array<i64: 16, 128>}, {pipeline_mode = #tpu.pipeline_mode<synchronous>, transform_indices = @transform_10, window_bounds = array<i64: 16, 128>}, {pipeline_mode = #tpu.pipeline_mode<synchronous>, transform_indices = @transform_11, window_bounds = array<i64: 8, 16>}, {pipeline_mode = #tpu.pipeline_mode<synchronous>, transform_indices = @transform_12, window_bounds = array<i64: 8, 1>}, {transform_indices = @transform_13, window_bounds = array<i64: 1, 8, 256>}]} {
    %c0 = arith.constant 0 : index
    %c0_0 = arith.constant 0 : index
    %c0_1 = arith.constant 0 : index
    %0 = vector.load %arg1[%c0, %c0_0, %c0_1] : memref<1x8x256xf32, #tpu.memory_space<vmem>>, vector<1x8x256xf32>
    %1 = vector.shape_cast %0 : vector<1x8x256xf32> to vector<8x256xf32>
    %c0_2 = arith.constant 0 : index
    %c0_3 = arith.constant 0 : index
    %2 = vector.load %arg2[%c0_2, %c0_3] : memref<16x8xf32, #tpu.memory_space<vmem>>, vector<16x8xf32>
    %c0_4 = arith.constant 0 : index
    %c0_5 = arith.constant 0 : index
    %3 = vector.load %arg3[%c0_4, %c0_5] : memref<16x1xf32, #tpu.memory_space<vmem>>, vector<16x1xf32>
    %c0_6 = arith.constant 0 : index
    %c0_7 = arith.constant 0 : index
    %4 = vector.load %arg4[%c0_6, %c0_7] : memref<16x1xf32, #tpu.memory_space<vmem>>, vector<16x1xf32>
    %c0_8 = arith.constant 0 : index
    %c0_9 = arith.constant 0 : index
    %5 = vector.load %arg5[%c0_8, %c0_9] : memref<16x128xf32, #tpu.memory_space<vmem>>, vector<16x128xf32>
    %c0_10 = arith.constant 0 : index
    %c0_11 = arith.constant 0 : index
    %6 = vector.load %arg6[%c0_10, %c0_11] : memref<16x128xf32, #tpu.memory_space<vmem>>, vector<16x128xf32>
    %c0_12 = arith.constant 0 : index
    %c0_13 = arith.constant 0 : index
    %7 = vector.load %arg7[%c0_12, %c0_13] : memref<16x48xf32, #tpu.memory_space<vmem>>, vector<16x48xf32>
    %c0_14 = arith.constant 0 : index
    %c0_15 = arith.constant 0 : index
    %8 = vector.load %arg8[%c0_14, %c0_15] : memref<16x1xf32, #tpu.memory_space<vmem>>, vector<16x1xf32>
    %c0_16 = arith.constant 0 : index
    %9 = memref.load %arg9[%c0_16] : memref<1xf32, #tpu.memory_space<smem>>
    %c0_17 = arith.constant 0 : index
    %c0_18 = arith.constant 0 : index
    %10 = vector.load %arg10[%c0_17, %c0_18] : memref<16x128xf32, #tpu.memory_space<vmem>>, vector<16x128xf32>
    %c0_19 = arith.constant 0 : index
    %c0_20 = arith.constant 0 : index
    %11 = vector.load %arg11[%c0_19, %c0_20] : memref<16x128xf32, #tpu.memory_space<vmem>>, vector<16x128xf32>
    %c0_21 = arith.constant 0 : index
    %c0_22 = arith.constant 0 : index
    %12 = vector.load %arg12[%c0_21, %c0_22] : memref<8x16xf32, #tpu.memory_space<vmem>>, vector<8x16xf32>
    %c0_23 = arith.constant 0 : index
    %c0_24 = arith.constant 0 : index
    %13 = vector.load %arg13[%c0_23, %c0_24] : memref<8x1xf32, #tpu.memory_space<vmem>>, vector<8x1xf32>
    %14 = tpu.iota {dimensions = array<i32: 1>} : vector<1x256xi32>
    %c128_i32 = arith.constant 128 : i32
    %c0_i32 = arith.constant 0 : i32
    %15 = arith.cmpi eq, %c128_i32, %c0_i32 : i32
    %c1_i32 = arith.constant 1 : i32
    %16 = arith.select %15, %c1_i32, %c128_i32 : i32
    %17 = vector.broadcast %16 : i32 to vector<1x256xi32>
    %18 = arith.remsi %14, %17 : vector<1x256xi32>
    %c0_i32_25 = arith.constant 0 : i32
    %19 = vector.broadcast %c0_i32_25 : i32 to vector<1x256xi32>
    %20 = arith.cmpi ne, %18, %19 : vector<1x256xi32>
    %c0_i32_26 = arith.constant 0 : i32
    %21 = vector.broadcast %c0_i32_26 : i32 to vector<1x256xi32>
    %22 = arith.cmpi slt, %18, %21 : vector<1x256xi32>
    %c0_i32_27 = arith.constant 0 : i32
    %23 = arith.cmpi slt, %16, %c0_i32_27 : i32
    %24 = vector.broadcast %23 : i1 to vector<1x256xi1>
    %25 = vector.broadcast %24 : vector<1x256xi1> to vector<1x256xi1>
    %26 = arith.xori %22, %25 : vector<1x256xi1>
    %27 = arith.andi %26, %20 : vector<1x256xi1>
    %28 = vector.broadcast %16 : i32 to vector<1x256xi32>
    %29 = arith.addi %18, %28 : vector<1x256xi32>
    %30 = arith.select %27, %29, %18 : vector<1x256xi1>, vector<1x256xi32>
    %c2_i32 = arith.constant 2 : i32
    %31 = vector.broadcast %c2_i32 : i32 to vector<1x256xi32>
    %32 = arith.cmpi sge, %30, %31 : vector<1x256xi32>
    %c126_i32 = arith.constant 126 : i32
    %33 = vector.broadcast %c126_i32 : i32 to vector<1x256xi32>
    %34 = arith.cmpi slt, %30, %33 : vector<1x256xi32>
    %cst = arith.constant dense<0.000000e+00> : vector<16x256xf32>
    %35 = tpu.matmul %2, %1, %cst {dimension_numbers = #tpu.dot_dimension_numbers<[1], [0], [0], [1], [0, 0, 1, 1], [], []>} : vector<16x8xf32>, vector<8x256xf32>, vector<16x256xf32> -> vector<16x256xf32>
    %36 = vector.broadcast %3 : vector<16x1xf32> to vector<16x256xf32>
    %37 = arith.addf %35, %36 : vector<16x256xf32>
    %cst_28 = arith.constant 0.000000e+00 : f32
    %38 = vector.broadcast %cst_28 : f32 to vector<16x256xf32>
    %39 = arith.cmpf ogt, %37, %38 : vector<16x256xf32>
    %40 = vector.broadcast %4 : vector<16x1xf32> to vector<16x256xf32>
    %41 = arith.mulf %40, %37 : vector<16x256xf32>
    %42 = arith.select %39, %37, %41 : vector<16x256xi1>, vector<16x256xf32>
    %43 = vector.extract_strided_slice %42 {offsets = [0, 0], sizes = [16, 128], strides = [1, 1]} : vector<16x256xf32> to vector<16x128xf32>
    %44 = vector.shape_cast %43 : vector<16x128xf32> to vector<1x16x128xf32>
    %cst_29 = arith.constant dense<0.000000e+00> : vector<1xf32>
    %45 = vector.multi_reduction <add>, %44, %cst_29 [1, 2] : vector<1x16x128xf32> to vector<1xf32>
    %46 = vector.shape_cast %45 : vector<1xf32> to vector<1x1x1xf32>
    %47 = vector.extract %46[0, 0, 0] : f32 from vector<1x1x1xf32>
    %cst_30 = arith.constant 2.048000e+03 : f32
    %48 = arith.divf %47, %cst_30 : f32
    %49 = vector.broadcast %48 : f32 to vector<16x128xf32>
    %50 = arith.subf %43, %49 : vector<16x128xf32>
    %51 = arith.mulf %50, %50 : vector<16x128xf32>
    %52 = vector.shape_cast %51 : vector<16x128xf32> to vector<1x16x128xf32>
    %cst_31 = arith.constant dense<0.000000e+00> : vector<1xf32>
    %53 = vector.multi_reduction <add>, %52, %cst_31 [1, 2] : vector<1x16x128xf32> to vector<1xf32>
    %54 = vector.shape_cast %53 : vector<1xf32> to vector<1x1x1xf32>
    %55 = vector.extract %54[0, 0, 0] : f32 from vector<1x1x1xf32>
    %cst_32 = arith.constant 2.048000e+03 : f32
    %56 = arith.divf %55, %cst_32 : f32
    %cst_33 = arith.constant 9.99999974E-6 : f32
    %57 = arith.addf %56, %cst_33 : f32
    %58 = math.rsqrt %57 : f32
    %59 = vector.broadcast %58 : f32 to vector<16x128xf32>
    %60 = arith.mulf %50, %59 : vector<16x128xf32>
    %61 = arith.mulf %60, %5 : vector<16x128xf32>
    %62 = arith.addf %61, %6 : vector<16x128xf32>
    %63 = vector.extract_strided_slice %42 {offsets = [0, 128], sizes = [16, 128], strides = [1, 1]} : vector<16x256xf32> to vector<16x128xf32>
    %64 = vector.shape_cast %63 : vector<16x128xf32> to vector<1x16x128xf32>
    %cst_34 = arith.constant dense<0.000000e+00> : vector<1xf32>
    %65 = vector.multi_reduction <add>, %64, %cst_34 [1, 2] : vector<1x16x128xf32> to vector<1xf32>
    %66 = vector.shape_cast %65 : vector<1xf32> to vector<1x1x1xf32>
    %67 = vector.extract %66[0, 0, 0] : f32 from vector<1x1x1xf32>
    %cst_35 = arith.constant 2.048000e+03 : f32
    %68 = arith.divf %67, %cst_35 : f32
    %69 = vector.broadcast %68 : f32 to vector<16x128xf32>
    %70 = arith.subf %63, %69 : vector<16x128xf32>
    %71 = arith.mulf %70, %70 : vector<16x128xf32>
    %72 = vector.shape_cast %71 : vector<16x128xf32> to vector<1x16x128xf32>
    %cst_36 = arith.constant dense<0.000000e+00> : vector<1xf32>
    %73 = vector.multi_reduction <add>, %72, %cst_36 [1, 2] : vector<1x16x128xf32> to vector<1xf32>
    %74 = vector.shape_cast %73 : vector<1xf32> to vector<1x1x1xf32>
    %75 = vector.extract %74[0, 0, 0] : f32 from vector<1x1x1xf32>
    %cst_37 = arith.constant 2.048000e+03 : f32
    %76 = arith.divf %75, %cst_37 : f32
    %cst_38 = arith.constant 9.99999974E-6 : f32
    %77 = arith.addf %76, %cst_38 : f32
    %78 = math.rsqrt %77 : f32
    %79 = vector.broadcast %78 : f32 to vector<16x128xf32>
    %80 = arith.mulf %70, %79 : vector<16x128xf32>
    %81 = arith.mulf %80, %5 : vector<16x128xf32>
    %82 = arith.addf %81, %6 : vector<16x128xf32>
    %83 = tpu.concatenate %62, %82 in 1 : vector<16x128xf32>, vector<16x128xf32> -> vector<16x256xf32>
    %c2_i32_39 = arith.constant 2 : i32
    %84 = tpu.dynamic_rotate %83 by %c2_i32_39 dim 1 : vector<16x256xf32>, i32 -> vector<16x256xf32>
    %cst_40 = arith.constant 0.000000e+00 : f32
    %85 = vector.shape_cast %32 : vector<1x256xi1> to vector<1x256xi1>
    %86 = vector.broadcast %85 : vector<1x256xi1> to vector<16x256xi1>
    %87 = vector.broadcast %cst_40 : f32 to vector<16x256xf32>
    %88 = arith.select %86, %84, %87 : vector<16x256xi1>, vector<16x256xf32>
    %c254_i32 = arith.constant 254 : i32
    %89 = tpu.dynamic_rotate %83 by %c254_i32 dim 1 : vector<16x256xf32>, i32 -> vector<16x256xf32>
    %cst_41 = arith.constant 0.000000e+00 : f32
    %90 = vector.shape_cast %34 : vector<1x256xi1> to vector<1x256xi1>
    %91 = vector.broadcast %90 : vector<1x256xi1> to vector<16x256xi1>
    %92 = vector.broadcast %cst_41 : f32 to vector<16x256xf32>
    %93 = arith.select %91, %89, %92 : vector<16x256xi1>, vector<16x256xf32>
    %94 = tpu.concatenate %88, %83, %93 in 0 : vector<16x256xf32>, vector<16x256xf32>, vector<16x256xf32> -> vector<48x256xf32>
    %cst_42 = arith.constant dense<0.000000e+00> : vector<16x256xf32>
    %95 = tpu.matmul %7, %94, %cst_42 {dimension_numbers = #tpu.dot_dimension_numbers<[1], [0], [0], [1], [0, 0, 1, 1], [], []>} : vector<16x48xf32>, vector<48x256xf32>, vector<16x256xf32> -> vector<16x256xf32>
    %96 = vector.broadcast %8 : vector<16x1xf32> to vector<16x256xf32>
    %97 = arith.addf %95, %96 : vector<16x256xf32>
    %cst_43 = arith.constant 0.000000e+00 : f32
    %98 = vector.broadcast %cst_43 : f32 to vector<16x256xf32>
    %99 = arith.cmpf ogt, %97, %98 : vector<16x256xf32>
    %100 = vector.broadcast %9 : f32 to vector<16x256xf32>
    %101 = arith.mulf %100, %97 : vector<16x256xf32>
    %102 = arith.select %99, %97, %101 : vector<16x256xi1>, vector<16x256xf32>
    %103 = vector.extract_strided_slice %102 {offsets = [0, 0], sizes = [16, 128], strides = [1, 1]} : vector<16x256xf32> to vector<16x128xf32>
    %104 = vector.shape_cast %103 : vector<16x128xf32> to vector<1x16x128xf32>
    %cst_44 = arith.constant dense<0.000000e+00> : vector<1xf32>
    %105 = vector.multi_reduction <add>, %104, %cst_44 [1, 2] : vector<1x16x128xf32> to vector<1xf32>
    %106 = vector.shape_cast %105 : vector<1xf32> to vector<1x1x1xf32>
    %107 = vector.extract %106[0, 0, 0] : f32 from vector<1x1x1xf32>
    %cst_45 = arith.constant 2.048000e+03 : f32
    %108 = arith.divf %107, %cst_45 : f32
    %109 = vector.broadcast %108 : f32 to vector<16x128xf32>
    %110 = arith.subf %103, %109 : vector<16x128xf32>
    %111 = arith.mulf %110, %110 : vector<16x128xf32>
    %112 = vector.shape_cast %111 : vector<16x128xf32> to vector<1x16x128xf32>
    %cst_46 = arith.constant dense<0.000000e+00> : vector<1xf32>
    %113 = vector.multi_reduction <add>, %112, %cst_46 [1, 2] : vector<1x16x128xf32> to vector<1xf32>
    %114 = vector.shape_cast %113 : vector<1xf32> to vector<1x1x1xf32>
    %115 = vector.extract %114[0, 0, 0] : f32 from vector<1x1x1xf32>
    %cst_47 = arith.constant 2.048000e+03 : f32
    %116 = arith.divf %115, %cst_47 : f32
    %cst_48 = arith.constant 9.99999974E-6 : f32
    %117 = arith.addf %116, %cst_48 : f32
    %118 = math.rsqrt %117 : f32
    %119 = vector.broadcast %118 : f32 to vector<16x128xf32>
    %120 = arith.mulf %110, %119 : vector<16x128xf32>
    %121 = arith.mulf %120, %10 : vector<16x128xf32>
    %122 = arith.addf %121, %11 : vector<16x128xf32>
    %123 = vector.extract_strided_slice %102 {offsets = [0, 128], sizes = [16, 128], strides = [1, 1]} : vector<16x256xf32> to vector<16x128xf32>
    %124 = vector.shape_cast %123 : vector<16x128xf32> to vector<1x16x128xf32>
    %cst_49 = arith.constant dense<0.000000e+00> : vector<1xf32>
    %125 = vector.multi_reduction <add>, %124, %cst_49 [1, 2] : vector<1x16x128xf32> to vector<1xf32>
    %126 = vector.shape_cast %125 : vector<1xf32> to vector<1x1x1xf32>
    %127 = vector.extract %126[0, 0, 0] : f32 from vector<1x1x1xf32>
    %cst_50 = arith.constant 2.048000e+03 : f32
    %128 = arith.divf %127, %cst_50 : f32
    %129 = vector.broadcast %128 : f32 to vector<16x128xf32>
    %130 = arith.subf %123, %129 : vector<16x128xf32>
    %131 = arith.mulf %130, %130 : vector<16x128xf32>
    %132 = vector.shape_cast %131 : vector<16x128xf32> to vector<1x16x128xf32>
    %cst_51 = arith.constant dense<0.000000e+00> : vector<1xf32>
    %133 = vector.multi_reduction <add>, %132, %cst_51 [1, 2] : vector<1x16x128xf32> to vector<1xf32>
    %134 = vector.shape_cast %133 : vector<1xf32> to vector<1x1x1xf32>
    %135 = vector.extract %134[0, 0, 0] : f32 from vector<1x1x1xf32>
    %cst_52 = arith.constant 2.048000e+03 : f32
    %136 = arith.divf %135, %cst_52 : f32
    %cst_53 = arith.constant 9.99999974E-6 : f32
    %137 = arith.addf %136, %cst_53 : f32
    %138 = math.rsqrt %137 : f32
    %139 = vector.broadcast %138 : f32 to vector<16x128xf32>
    %140 = arith.mulf %130, %139 : vector<16x128xf32>
    %141 = arith.mulf %140, %10 : vector<16x128xf32>
    %142 = arith.addf %141, %11 : vector<16x128xf32>
    %143 = tpu.concatenate %122, %142 in 1 : vector<16x128xf32>, vector<16x128xf32> -> vector<16x256xf32>
    %cst_54 = arith.constant dense<0.000000e+00> : vector<8x256xf32>
    %144 = tpu.matmul %12, %143, %cst_54 {dimension_numbers = #tpu.dot_dimension_numbers<[1], [0], [0], [1], [0, 0, 1, 1], [], []>} : vector<8x16xf32>, vector<16x256xf32>, vector<8x256xf32> -> vector<8x256xf32>
    %145 = vector.broadcast %13 : vector<8x1xf32> to vector<8x256xf32>
    %146 = arith.addf %144, %145 : vector<8x256xf32>
    %147 = arith.addf %146, %1 : vector<8x256xf32>
    %c0_55 = arith.constant 0 : index
    %c0_56 = arith.constant 0 : index
    %c0_57 = arith.constant 0 : index
    %148 = vector.load %arg14[%c0_55, %c0_56, %c0_57] : memref<1x8x256xf32, #tpu.memory_space<vmem>>, vector<1x8x256xf32>
    %149 = vector.shape_cast %148 : vector<1x8x256xf32> to vector<8x256xf32>
    %150 = vector.shape_cast %147 : vector<8x256xf32> to vector<1x8x256xf32>
    tpu.vector_store %arg14[%c0_55, %c0_56, %c0_57], %150 {strides = array<i32>} : memref<1x8x256xf32, #tpu.memory_space<vmem>>, vector<1x8x256xf32>,
    return
  }
  func.func @transform_0(%arg0: i32) -> (i32, i32, i32) {
    %c0_i32 = arith.constant 0 : i32
    %c0_i32_0 = arith.constant 0 : i32
    %c0_i32_1 = arith.constant 0 : i32
    return %arg0, %c0_i32, %c0_i32_0 : i32, i32, i32
  }
  func.func @transform_1(%arg0: i32) -> (i32, i32) {
    %c0_i32 = arith.constant 0 : i32
    %c0_i32_0 = arith.constant 0 : i32
    %c0_i32_1 = arith.constant 0 : i32
    return %c0_i32, %c0_i32_0 : i32, i32
  }
  func.func @transform_2(%arg0: i32) -> (i32, i32) {
    %c0_i32 = arith.constant 0 : i32
    %c0_i32_0 = arith.constant 0 : i32
    %c0_i32_1 = arith.constant 0 : i32
    return %c0_i32, %c0_i32_0 : i32, i32
  }
  func.func @transform_3(%arg0: i32) -> (i32, i32) {
    %c0_i32 = arith.constant 0 : i32
    %c0_i32_0 = arith.constant 0 : i32
    %c0_i32_1 = arith.constant 0 : i32
    return %c0_i32, %c0_i32_0 : i32, i32
  }
  func.func @transform_4(%arg0: i32) -> (i32, i32) {
    %c0_i32 = arith.constant 0 : i32
    %c0_i32_0 = arith.constant 0 : i32
    %c0_i32_1 = arith.constant 0 : i32
    return %c0_i32, %c0_i32_0 : i32, i32
  }
  func.func @transform_5(%arg0: i32) -> (i32, i32) {
    %c0_i32 = arith.constant 0 : i32
    %c0_i32_0 = arith.constant 0 : i32
    %c0_i32_1 = arith.constant 0 : i32
    return %c0_i32, %c0_i32_0 : i32, i32
  }
  func.func @transform_6(%arg0: i32) -> (i32, i32) {
    %c0_i32 = arith.constant 0 : i32
    %c0_i32_0 = arith.constant 0 : i32
    %c0_i32_1 = arith.constant 0 : i32
    return %c0_i32, %c0_i32_0 : i32, i32
  }
  func.func @transform_7(%arg0: i32) -> (i32, i32) {
    %c0_i32 = arith.constant 0 : i32
    %c0_i32_0 = arith.constant 0 : i32
    %c0_i32_1 = arith.constant 0 : i32
    return %c0_i32, %c0_i32_0 : i32, i32
  }
  func.func @transform_8(%arg0: i32) -> i32 {
    %c0_i32 = arith.constant 0 : i32
    %c0_i32_0 = arith.constant 0 : i32
    return %c0_i32 : i32
  }
  func.func @transform_9(%arg0: i32) -> (i32, i32) {
    %c0_i32 = arith.constant 0 : i32
    %c0_i32_0 = arith.constant 0 : i32
    %c0_i32_1 = arith.constant 0 : i32
    return %c0_i32, %c0_i32_0 : i32, i32
  }
  func.func @transform_10(%arg0: i32) -> (i32, i32) {
    %c0_i32 = arith.constant 0 : i32
    %c0_i32_0 = arith.constant 0 : i32
    %c0_i32_1 = arith.constant 0 : i32
    return %c0_i32, %c0_i32_0 : i32, i32
  }
  func.func @transform_11(%arg0: i32) -> (i32, i32) {
    %c0_i32 = arith.constant 0 : i32
    %c0_i32_0 = arith.constant 0 : i32
    %c0_i32_1 = arith.constant 0 : i32
    return %c0_i32, %c0_i32_0 : i32, i32
  }
  func.func @transform_12(%arg0: i32) -> (i32, i32) {
    %c0_i32 = arith.constant 0 : i32
    %c0_i32_0 = arith.constant 0 : i32
    %c0_i32_1 = arith.constant 0 : i32
    return %c0_i32, %c0_i32_0 : i32, i32
  }
  func.func @transform_13(%arg0: i32) -> (i32, i32, i32) {
    %c0_i32 = arith.constant 0 : i32
    %c0_i32_0 = arith.constant 0 : i32
    %c0_i32_1 = arith.constant 0 : i32
    return %arg0, %c0_i32, %c0_i32_0 : i32, i32, i32
  }
}

</mosaic_0001>

<llo_original>
// kernel: tpu_custom_call.1
$region0: #{tpu_custom_call.1}
  #allocation0 [shape = 'u32[]', space=smem, size = 0x4, offset = 0x4, fixed_abs, tag = 'smem constant byte address 0x4 - core index']
  #allocation1 [shape = 'u32[144,128]{1,0:T(1,128)}', space=vmem, size = 0x12000, scoped, tag = 'internal scratch']
  %s0 = inlined_call_operand.hbm [shape: f32[8,128], index: 0, kind: input, shape index: {}]
  %s1 = inlined_call_operand.hbm [shape: f32[16,128], index: 1, kind: output, shape index: {}]
  %s2 = sld [smem:[#allocation0]]
  $region41: #{tpu_custom_call.1} parent=0
    _
  %s4 = ssub.s32 1, %s2
  %s5 = scalar_select 0, %s4, %s2
  $region1: #{tpu_custom_call.1} parent=0
    #allocation2 [shape = 'u8[4096]{0}', space=vmem, size = 0x1000, scoped, tag = 'input window, operand 0, single buffered']
    #allocation3 [shape = 's32[2]{0}', space=sflag, size = 0x8, scoped, tag = 'scoped memory for tpu_custom_call.1']
    #allocation4 [shape = 's32[2]{0}', space=sflag, size = 0x8, scoped, tag = 'scoped memory for tpu_custom_call.1']
    #allocation5 [shape = 'u8[8192]{0}', space=vmem, size = 0x2000, scoped, tag = 'output window, operand 0']
    %6 = vsyncpa [#allocation3], 0
    %7 = vsyncpa [#allocation4], 0
    %s8 = scalar_lea.sflag [#allocation4], 1
    %9 = vsyncpa %s8, 0
    loop: start=0, step=1, limit=4
    $region2: #{tpu_custom_call.1} parent=1 // loop_pre_header
      _
    $region3: #{tpu_custom_call.1} parent=1 // loop_header
      %s11 = sphi 0, %s15
      %p12 = scmp.ge.s32.totalorder %s11, 4
      %s19 = sphi 0, %s19
      %s21 = sphi 0, %s19
      %s22 = sphi 0, %s21
      %s36 = sphi 0, %s22
      %s42 = sphi 0, %s44
      %s45 = sphi 0, %s42
      %s46 = sphi 0, %s45
      %s62 = sphi 0, %s46
    $region4: #{tpu_custom_call.1} parent=1 // loop_header_branch
      %14 = sbr.rel (%p12) target = $region8
    $region5: #{tpu_custom_call.1} parent=1 // loop_body
      %s16 = ssub.s32 %s11, 1
      %s17 = ssub.s32 %s11, 2
      %s18 = sadd.s32 %s11, 1
      %s20 = sadd.s32 %s19, 1
      %p23 = scmp.eq.s32.totalorder %s11, 1
      %p24 = scmp.ne.s32.totalorder %s19, %s21
      %p25 = scmp.eq.s32.totalorder %s11, 0
      %p26 = por %p24, %p25
      %p27 = scmp.ne.s32.totalorder %s19, %s21
      %p28 = scmp.eq.s32.totalorder %s16, 1
      %p29 = por %p27, %p28
      %p30 = scmp.ne.s32.totalorder %s21, %s22
      %p31 = scmp.eq.s32.totalorder %s16, 0
      %p32 = por %p30, %p31
      %p33 = scmp.ne.s32.totalorder %s21, %s22
      %p34 = scmp.eq.s32.totalorder %s17, 1
      %p35 = por %p33, %p34
      %p37 = scmp.ne.s32.totalorder %s22, %s36
      %p38 = scmp.eq.s32.totalorder %s17, 0
      %p39 = por %p37, %p38
      %s40 = ssub.s32 %s11, %s18
      %p41 = scmp.eq.s32.totalorder %s40, 0
      %s43 = sadd.s32 %s42, 1
      %s44 = scalar_select %p41, %s42, %s43
      %p47 = pneg %p41
      %p48 = scmp.eq.s32.totalorder %s11, 1
      %p49 = por %p47, %p48
      %p50 = scmp.ne.s32.totalorder %s42, %s45
      %p51 = scmp.eq.s32.totalorder %s11, 0
      %p52 = por %p50, %p51
      %p53 = scmp.ne.s32.totalorder %s42, %s45
      %p54 = scmp.eq.s32.totalorder %s16, 1
      %p55 = por %p53, %p54
      %p56 = scmp.ne.s32.totalorder %s45, %s46
      %p57 = scmp.eq.s32.totalorder %s16, 0
      %p58 = por %p56, %p57
      %p59 = scmp.ne.s32.totalorder %s45, %s46
      %p60 = scmp.eq.s32.totalorder %s17, 1
      %p61 = por %p59, %p60
      %p63 = scmp.ne.s32.totalorder %s46, %s62
      %p64 = scmp.eq.s32.totalorder %s17, 0
      %p65 = por %p63, %p64
      %p66 = scmp.le.s32.totalorder 1, %s11
      %p67 = scmp.lt.s32.totalorder %s11, 3
      %p68 = pnand %p66, %p67
      %p69 = pneg %p68
      // Predicated region
      $region9: #{tpu_custom_call.1} parent=5 // pred_check
        _
      $region10: #{tpu_custom_call.1} parent=5 // pred_check_branch
        %71 = sbr.rel (%p68) target = $region12
      $region11: #{tpu_custom_call.1} parent=5 // pred_region
        %s72 = ssub.s32 %s11, 1
        // Predicated region
        $region13: #{tpu_custom_call.1} parent=11 // pred_check
          %p73 = pneg %p32
        $region14: #{tpu_custom_call.1} parent=11 // pred_check_branch
          %75 = sbr.rel (%p73) target = $region16
        $region15: #{tpu_custom_call.1} parent=11 // pred_region
          %s77 = ssub.s32 128, 128
          %78 = vsyncadd [#allocation3], %s77
          %s80 = sshll.u32 [#allocation2], 4
          %s81 = int_to_ptr.vmem [resolvable:$true] %s80
          %83 = dma.hbm_to_vmem [thread:$0]  %s0, 128, %s81, [#allocation3]
        $region16: #{tpu_custom_call.1} parent=11 // pred_fallthru
          _
      $region12: #{tpu_custom_call.1} parent=5 // pred_fallthru
        _
      %p84 = scmp.lt.s32.totalorder %s11, 2
      // Predicated region
      $region17: #{tpu_custom_call.1} parent=5 // pred_check
        %p85 = pneg %p84
      $region18: #{tpu_custom_call.1} parent=5 // pred_check_branch
        %87 = sbr.rel (%p85) target = $region20
      $region19: #{tpu_custom_call.1} parent=5 // pred_region
        _
      $region20: #{tpu_custom_call.1} parent=5 // pred_fallthru
        _
      %p88 = scmp.le.s32.totalorder 1, %s11
      %p89 = scmp.lt.s32.totalorder %s11, 3
      %p90 = pnand %p88, %p89
      %p91 = pneg %p90
      // Predicated region
      $region21: #{tpu_custom_call.1} parent=5 // pred_check
        _
      $region22: #{tpu_custom_call.1} parent=5 // pred_check_branch
        %93 = sbr.rel (%p90) target = $region24
      $region23: #{tpu_custom_call.1} parent=5 // pred_region
        %s94 = ssub.s32 %s11, 1
        // Predicated region
        $region25: #{tpu_custom_call.1} parent=23 // pred_check
          %p95 = pneg %p32
        $region26: #{tpu_custom_call.1} parent=23 // pred_check_branch
          %97 = sbr.rel (%p95) target = $region28
        $region27: #{tpu_custom_call.1} parent=23 // pred_region
          %98 = dma.done [#allocation3], 128
        $region28: #{tpu_custom_call.1} parent=23 // pred_fallthru
          _
        %p99 = pneg %p32
        %p100 = pneg %p29
        %p101 = pneg %p58
        %p102 = pneg %p55
        %s103 = sand.u32 %s45, 1
        %s104 = scalar_lea.sflag [#allocation4], %s103
        %s105 = sand.u32 %s45, 1
        %s106 = smul.addr %s105, 8
        %s107 = scalar_lea.vmem [#allocation5], %s106
        %v108 = vld [vmem:[#allocation2] sm:$0xff]
        %109 = vst [vmem:[%s107] sm:$0xff] %v108
        %s110 = sand.u32 %s45, 1
        %s111 = scalar_lea.sflag [#allocation4], %s110
        %s112 = sand.u32 %s45, 1
        %s113 = smul.addr %s112, 8
        %s114 = scalar_lea.vmem [#allocation5], %s113
        // Predicated region
        $region29: #{tpu_custom_call.1} parent=23 // pred_check
          %p115 = pneg %p55
        $region30: #{tpu_custom_call.1} parent=23 // pred_check_branch
          %117 = sbr.rel (%p115) target = $region32
        $region31: #{tpu_custom_call.1} parent=23 // pred_region
          %s119 = ssub.s32 128, 128
          %120 = vsyncadd %s111, %s119
          %s121 = smul.addr %s16, 128
          %s122 = scalar_lea.hbm %s1, %s121
          %s124 = sshll.u32 %s114, 4
          %s125 = int_to_ptr.vmem [resolvable:$true] %s124
          %127 = dma.vmem_to_hbm [thread:$0]  %s125, 128, %s122, %s111
        $region32: #{tpu_custom_call.1} parent=23 // pred_fallthru
          _
      $region24: #{tpu_custom_call.1} parent=5 // pred_fallthru
        _
      %p128 = scmp.le.s32.totalorder 2, %s11
      // Predicated region
      $region33: #{tpu_custom_call.1} parent=5 // pred_check
        %p129 = pneg %p128
      $region34: #{tpu_custom_call.1} parent=5 // pred_check_branch
        %131 = sbr.rel (%p129) target = $region36
      $region35: #{tpu_custom_call.1} parent=5 // pred_region
        %s132 = ssub.s32 %s11, 2
        // Predicated region
        $region37: #{tpu_custom_call.1} parent=35 // pred_check
          %p133 = pneg %p61
        $region38: #{tpu_custom_call.1} parent=35 // pred_check_branch
          %135 = sbr.rel (%p133) target = $region40
        $region39: #{tpu_custom_call.1} parent=35 // pred_region
          %s136 = sand.u32 %s46, 1
          %s137 = scalar_lea.sflag [#allocation4], %s136
          %s138 = sand.u32 %s46, 1
          %s139 = smul.addr %s138, 8
          %s140 = scalar_lea.vmem [#allocation5], %s139
          %141 = dma.done %s137, 128
        $region40: #{tpu_custom_call.1} parent=35 // pred_fallthru
          _
      $region36: #{tpu_custom_call.1} parent=5 // pred_fallthru
        _
    $region6: #{tpu_custom_call.1} parent=1 // loop_footer
      %s15 = sadd.s32 1, %s11
    $region7: #{tpu_custom_call.1} parent=1 // loop_footer_branch
      %10 = sbr.rel target = $region3
    $region8: #{tpu_custom_call.1} parent=1 // loop_exit
      _
    %142 = vsyncpa [#allocation3], 1
    %s143 = scalar_lea.sflag [#allocation3], 1
    %144 = vsyncpa %s143, 1
    %145 = vsyncpa [#allocation4], 1
    %s146 = scalar_lea.sflag [#allocation4], 1
    %147 = vsyncpa %s146, 1

// kernel: tpu_custom_call.1
$region0: #{tpu_custom_call.1}
  #allocation0 [shape = 'u32[]', space=smem, size = 0x4, offset = 0x4, fixed_abs, tag = 'smem constant byte address 0x4 - core index']
  #allocation1 [shape = 'u32[144,128]{1,0:T(1,128)}', space=vmem, size = 0x12000, scoped, tag = 'internal scratch']
  #allocation2 [shape = 'f32[1]{0:T(128)S(6)}', space=smem, size = 0x200, scoped, tag = 'scoped memory for tpu_custom_call.1']
  %s0 = inlined_call_operand.vmem [shape: f32[2,8,256], index: 0, kind: input, shape index: {}]
  %s1 = inlined_call_operand.vmem [shape: f32[16,8], index: 1, kind: input, shape index: {}]
  %s2 = inlined_call_operand.vmem [shape: f32[16,1], index: 2, kind: input, shape index: {}]
  %s3 = inlined_call_operand.vmem [shape: f32[16,1], index: 3, kind: input, shape index: {}]
  %s4 = inlined_call_operand.vmem [shape: f32[16,128], index: 4, kind: input, shape index: {}]
  %s5 = inlined_call_operand.vmem [shape: f32[16,128], index: 5, kind: input, shape index: {}]
  %s6 = inlined_call_operand.vmem [shape: f32[16,48], index: 6, kind: input, shape index: {}]
  %s7 = inlined_call_operand.vmem [shape: f32[16,1], index: 7, kind: input, shape index: {}]
  %s8 = inlined_call_operand.<no memory space> [shape: f32[1], index: 8, kind: input, shape index: {}]
  %s9 = inlined_call_operand.vmem [shape: f32[16,128], index: 9, kind: input, shape index: {}]
  %s10 = inlined_call_operand.hbm [shape: f32[16,128], index: 10, kind: input, shape index: {}]
  %s11 = inlined_call_operand.vmem [shape: f32[8,16], index: 11, kind: input, shape index: {}]
  %s12 = inlined_call_operand.vmem [shape: f32[8,1], index: 12, kind: input, shape index: {}]
  %s13 = inlined_call_operand.hbm [shape: f32[2,8,256], index: 13, kind: output, shape index: {}]
  %s14 = sld [smem:[#allocation0]]
  $region89: #{tpu_custom_call.1} parent=0
    _
  %s16 = ssub.s32 1, %s14
  %s17 = scalar_select 0, %s16, %s14
  %18 = sst [smem:[#allocation2]] %s8
  $region1: #{tpu_custom_call.1} parent=0
    #allocation3 [shape = 'u8[8192]{0}', space=vmem, size = 0x2000, scoped, tag = 'input window, operand 10, single buffered']
    #allocation4 [shape = 's32[2]{0}', space=sflag, size = 0x8, scoped, tag = 'scoped memory for tpu_custom_call.1']
    #allocation5 [shape = 's32[2]{0}', space=sflag, size = 0x8, scoped, tag = 'scoped memory for tpu_custom_call.1']
    #allocation6 [shape = 'u8[16384]{0}', space=vmem, size = 0x4000, scoped, tag = 'output window, operand 0']
    %19 = vsyncpa [#allocation4], 0
    %20 = vsyncpa [#allocation5], 0
    %s21 = scalar_lea.sflag [#allocation5], 1
    %22 = vsyncpa %s21, 0
    loop: start=0, step=1, limit=4
    $region2: #{tpu_custom_call.1} parent=1 // loop_pre_header
      _
    $region3: #{tpu_custom_call.1} parent=1 // loop_header
      %s24 = sphi 0, %s28
      %p25 = scmp.ge.s32.totalorder %s24, 4
      %s34 = sphi 0, %s36
      %s37 = sphi 0, %s34
      %s38 = sphi 0, %s37
      %s54 = sphi 0, %s38
      %s58 = sphi 0, %s58
      %s60 = sphi 0, %s58
      %s61 = sphi 0, %s60
      %s75 = sphi 0, %s61
      %s79 = sphi 0, %s79
      %s81 = sphi 0, %s79
      %s82 = sphi 0, %s81
      %s96 = sphi 0, %s82
      %s100 = sphi 0, %s100
      %s102 = sphi 0, %s100
      %s103 = sphi 0, %s102
      %s117 = sphi 0, %s103
      %s121 = sphi 0, %s121
      %s123 = sphi 0, %s121
      %s124 = sphi 0, %s123
      %s138 = sphi 0, %s124
      %s142 = sphi 0, %s142
      %s144 = sphi 0, %s142
      %s145 = sphi 0, %s144
      %s159 = sphi 0, %s145
      %s163 = sphi 0, %s163
      %s165 = sphi 0, %s163
      %s166 = sphi 0, %s165
      %s180 = sphi 0, %s166
      %s184 = sphi 0, %s184
      %s186 = sphi 0, %s184
      %s187 = sphi 0, %s186
      %s201 = sphi 0, %s187
      %s205 = sphi 0, %s205
      %s207 = sphi 0, %s205
      %s208 = sphi 0, %s207
      %s222 = sphi 0, %s208
      %s226 = sphi 0, %s226
      %s228 = sphi 0, %s226
      %s229 = sphi 0, %s228
      %s243 = sphi 0, %s229
      %s247 = sphi 0, %s247
      %s249 = sphi 0, %s247
      %s250 = sphi 0, %s249
      %s264 = sphi 0, %s250
      %s268 = sphi 0, %s268
      %s270 = sphi 0, %s268
      %s271 = sphi 0, %s270
      %s285 = sphi 0, %s271
      %s289 = sphi 0, %s289
      %s291 = sphi 0, %s289
      %s292 = sphi 0, %s291
      %s306 = sphi 0, %s292
      %s312 = sphi 0, %s314
      %s315 = sphi 0, %s312
      %s316 = sphi 0, %s315
      %s332 = sphi 0, %s316
    $region4: #{tpu_custom_call.1} parent=1 // loop_header_branch
      %27 = sbr.rel (%p25) target = $region8
    $region5: #{tpu_custom_call.1} parent=1 // loop_body
      %s29 = ssub.s32 %s24, 1
      %s30 = ssub.s32 %s24, 2
      %s31 = sadd.s32 %s24, 1
      %s32 = ssub.s32 %s24, %s31
      %p33 = scmp.eq.s32.totalorder %s32, 0
      %s35 = sadd.s32 %s34, 1
      %s36 = scalar_select %p33, %s34, %s35
      %p39 = pneg %p33
      %p40 = scmp.eq.s32.totalorder %s24, 1
      %p41 = por %p39, %p40
      %p42 = scmp.ne.s32.totalorder %s34, %s37
      %p43 = scmp.eq.s32.totalorder %s24, 0
      %p44 = por %p42, %p43
      %p45 = scmp.ne.s32.totalorder %s34, %s37
      %p46 = scmp.eq.s32.totalorder %s29, 1
      %p47 = por %p45, %p46
      %p48 = scmp.ne.s32.totalorder %s37, %s38
      %p49 = scmp.eq.s32.totalorder %s29, 0
      %p50 = por %p48, %p49
      %p51 = scmp.ne.s32.totalorder %s37, %s38
      %p52 = scmp.eq.s32.totalorder %s30, 1
      %p53 = por %p51, %p52
      %p55 = scmp.ne.s32.totalorder %s38, %s54
      %p56 = scmp.eq.s32.totalorder %s30, 0
      %p57 = por %p55, %p56
      %s59 = sadd.s32 %s58, 1
      %p62 = scmp.eq.s32.totalorder %s24, 1
      %p63 = scmp.ne.s32.totalorder %s58, %s60
      %p64 = scmp.eq.s32.totalorder %s24, 0
      %p65 = por %p63, %p64
      %p66 = scmp.ne.s32.totalorder %s58, %s60
      %p67 = scmp.eq.s32.totalorder %s29, 1
      %p68 = por %p66, %p67
      %p69 = scmp.ne.s32.totalorder %s60, %s61
      %p70 = scmp.eq.s32.totalorder %s29, 0
      %p71 = por %p69, %p70
      %p72 = scmp.ne.s32.totalorder %s60, %s61
      %p73 = scmp.eq.s32.totalorder %s30, 1
      %p74 = por %p72, %p73
      %p76 = scmp.ne.s32.totalorder %s61, %s75
      %p77 = scmp.eq.s32.totalorder %s30, 0
      %p78 = por %p76, %p77
      %s80 = sadd.s32 %s79, 1
      %p83 = scmp.eq.s32.totalorder %s24, 1
      %p84 = scmp.ne.s32.totalorder %s79, %s81
      %p85 = scmp.eq.s32.totalorder %s24, 0
      %p86 = por %p84, %p85
      %p87 = scmp.ne.s32.totalorder %s79, %s81
      %p88 = scmp.eq.s32.totalorder %s29, 1
      %p89 = por %p87, %p88
      %p90 = scmp.ne.s32.totalorder %s81, %s82
      %p91 = scmp.eq.s32.totalorder %s29, 0
      %p92 = por %p90, %p91
      %p93 = scmp.ne.s32.totalorder %s81, %s82
      %p94 = scmp.eq.s32.totalorder %s30, 1
      %p95 = por %p93, %p94
      %p97 = scmp.ne.s32.totalorder %s82, %s96
      %p98 = scmp.eq.s32.totalorder %s30, 0
      %p99 = por %p97, %p98
      %s101 = sadd.s32 %s100, 1
      %p104 = scmp.eq.s32.totalorder %s24, 1
      %p105 = scmp.ne.s32.totalorder %s100, %s102
      %p106 = scmp.eq.s32.totalorder %s24, 0
      %p107 = por %p105, %p106
      %p108 = scmp.ne.s32.totalorder %s100, %s102
      %p109 = scmp.eq.s32.totalorder %s29, 1
      %p110 = por %p108, %p109
      %p111 = scmp.ne.s32.totalorder %s102, %s103
      %p112 = scmp.eq.s32.totalorder %s29, 0
      %p113 = por %p111, %p112
      %p114 = scmp.ne.s32.totalorder %s102, %s103
      %p115 = scmp.eq.s32.totalorder %s30, 1
      %p116 = por %p114, %p115
      %p118 = scmp.ne.s32.totalorder %s103, %s117
      %p119 = scmp.eq.s32.totalorder %s30, 0
      %p120 = por %p118, %p119
      %s122 = sadd.s32 %s121, 1
      %p125 = scmp.eq.s32.totalorder %s24, 1
      %p126 = scmp.ne.s32.totalorder %s121, %s123
      %p127 = scmp.eq.s32.totalorder %s24, 0
      %p128 = por %p126, %p127
      %p129 = scmp.ne.s32.totalorder %s121, %s123
      %p130 = scmp.eq.s32.totalorder %s29, 1
      %p131 = por %p129, %p130
      %p132 = scmp.ne.s32.totalorder %s123, %s124
      %p133 = scmp.eq.s32.totalorder %s29, 0
      %p134 = por %p132, %p133
      %p135 = scmp.ne.s32.totalorder %s123, %s124
      %p136 = scmp.eq.s32.totalorder %s30, 1
      %p137 = por %p135, %p136
      %p139 = scmp.ne.s32.totalorder %s124, %s138
      %p140 = scmp.eq.s32.totalorder %s30, 0
      %p141 = por %p139, %p140
      %s143 = sadd.s32 %s142, 1
      %p146 = scmp.eq.s32.totalorder %s24, 1
      %p147 = scmp.ne.s32.totalorder %s142, %s144
      %p148 = scmp.eq.s32.totalorder %s24, 0
      %p149 = por %p147, %p148
      %p150 = scmp.ne.s32.totalorder %s142, %s144
      %p151 = scmp.eq.s32.totalorder %s29, 1
      %p152 = por %p150, %p151
      %p153 = scmp.ne.s32.totalorder %s144, %s145
      %p154 = scmp.eq.s32.totalorder %s29, 0
      %p155 = por %p153, %p154
      %p156 = scmp.ne.s32.totalorder %s144, %s145
      %p157 = scmp.eq.s32.totalorder %s30, 1
      %p158 = por %p156, %p157
      %p160 = scmp.ne.s32.totalorder %s145, %s159
      %p161 = scmp.eq.s32.totalorder %s30, 0
      %p162 = por %p160, %p161
      %s164 = sadd.s32 %s163, 1
      %p167 = scmp.eq.s32.totalorder %s24, 1
      %p168 = scmp.ne.s32.totalorder %s163, %s165
      %p169 = scmp.eq.s32.totalorder %s24, 0
      %p170 = por %p168, %p169
      %p171 = scmp.ne.s32.totalorder %s163, %s165
      %p172 = scmp.eq.s32.totalorder %s29, 1
      %p173 = por %p171, %p172
      %p174 = scmp.ne.s32.totalorder %s165, %s166
      %p175 = scmp.eq.s32.totalorder %s29, 0
      %p176 = por %p174, %p175
      %p177 = scmp.ne.s32.totalorder %s165, %s166
      %p178 = scmp.eq.s32.totalorder %s30, 1
      %p179 = por %p177, %p178
      %p181 = scmp.ne.s32.totalorder %s166, %s180
      %p182 = scmp.eq.s32.totalorder %s30, 0
      %p183 = por %p181, %p182
      %s185 = sadd.s32 %s184, 1
      %p188 = scmp.eq.s32.totalorder %s24, 1
      %p189 = scmp.ne.s32.totalorder %s184, %s186
      %p190 = scmp.eq.s32.totalorder %s24, 0
      %p191 = por %p189, %p190
      %p192 = scmp.ne.s32.totalorder %s184, %s186
      %p193 = scmp.eq.s32.totalorder %s29, 1
      %p194 = por %p192, %p193
      %p195 = scmp.ne.s32.totalorder %s186, %s187
      %p196 = scmp.eq.s32.totalorder %s29, 0
      %p197 = por %p195, %p196
      %p198 = scmp.ne.s32.totalorder %s186, %s187
      %p199 = scmp.eq.s32.totalorder %s30, 1
      %p200 = por %p198, %p199
      %p202 = scmp.ne.s32.totalorder %s187, %s201
      %p203 = scmp.eq.s32.totalorder %s30, 0
      %p204 = por %p202, %p203
      %s206 = sadd.s32 %s205, 1
      %p209 = scmp.eq.s32.totalorder %s24, 1
      %p210 = scmp.ne.s32.totalorder %s205, %s207
      %p211 = scmp.eq.s32.totalorder %s24, 0
      %p212 = por %p210, %p211
      %p213 = scmp.ne.s32.totalorder %s205, %s207
      %p214 = scmp.eq.s32.totalorder %s29, 1
      %p215 = por %p213, %p214
      %p216 = scmp.ne.s32.totalorder %s207, %s208
      %p217 = scmp.eq.s32.totalorder %s29, 0
      %p218 = por %p216, %p217
      %p219 = scmp.ne.s32.totalorder %s207, %s208
      %p220 = scmp.eq.s32.totalorder %s30, 1
      %p221 = por %p219, %p220
      %p223 = scmp.ne.s32.totalorder %s208, %s222
      %p224 = scmp.eq.s32.totalorder %s30, 0
      %p225 = por %p223, %p224
      %s227 = sadd.s32 %s226, 1
      %p230 = scmp.eq.s32.totalorder %s24, 1
      %p231 = scmp.ne.s32.totalorder %s226, %s228
      %p232 = scmp.eq.s32.totalorder %s24, 0
      %p233 = por %p231, %p232
      %p234 = scmp.ne.s32.totalorder %s226, %s228
      %p235 = scmp.eq.s32.totalorder %s29, 1
      %p236 = por %p234, %p235
      %p237 = scmp.ne.s32.totalorder %s228, %s229
      %p238 = scmp.eq.s32.totalorder %s29, 0
      %p239 = por %p237, %p238
      %p240 = scmp.ne.s32.totalorder %s228, %s229
      %p241 = scmp.eq.s32.totalorder %s30, 1
      %p242 = por %p240, %p241
      %p244 = scmp.ne.s32.totalorder %s229, %s243
      %p245 = scmp.eq.s32.totalorder %s30, 0
      %p246 = por %p244, %p245
      %s248 = sadd.s32 %s247, 1
      %p251 = scmp.eq.s32.totalorder %s24, 1
      %p252 = scmp.ne.s32.totalorder %s247, %s249
      %p253 = scmp.eq.s32.totalorder %s24, 0
      %p254 = por %p252, %p253
      %p255 = scmp.ne.s32.totalorder %s247, %s249
      %p256 = scmp.eq.s32.totalorder %s29, 1
      %p257 = por %p255, %p256
      %p258 = scmp.ne.s32.totalorder %s249, %s250
      %p259 = scmp.eq.s32.totalorder %s29, 0
      %p260 = por %p258, %p259
      %p261 = scmp.ne.s32.totalorder %s249, %s250
      %p262 = scmp.eq.s32.totalorder %s30, 1
      %p263 = por %p261, %p262
      %p265 = scmp.ne.s32.totalorder %s250, %s264
      %p266 = scmp.eq.s32.totalorder %s30, 0
      %p267 = por %p265, %p266
      %s269 = sadd.s32 %s268, 1
      %p272 = scmp.eq.s32.totalorder %s24, 1
      %p273 = scmp.ne.s32.totalorder %s268, %s270
      %p274 = scmp.eq.s32.totalorder %s24, 0
      %p275 = por %p273, %p274
      %p276 = scmp.ne.s32.totalorder %s268, %s270
      %p277 = scmp.eq.s32.totalorder %s29, 1
      %p278 = por %p276, %p277
      %p279 = scmp.ne.s32.totalorder %s270, %s271
      %p280 = scmp.eq.s32.totalorder %s29, 0
      %p281 = por %p279, %p280
      %p282 = scmp.ne.s32.totalorder %s270, %s271
      %p283 = scmp.eq.s32.totalorder %s30, 1
      %p284 = por %p282, %p283
      %p286 = scmp.ne.s32.totalorder %s271, %s285
      %p287 = scmp.eq.s32.totalorder %s30, 0
      %p288 = por %p286, %p287
      %s290 = sadd.s32 %s289, 1
      %p293 = scmp.eq.s32.totalorder %s24, 1
      %p294 = scmp.ne.s32.totalorder %s289, %s291
      %p295 = scmp.eq.s32.totalorder %s24, 0
      %p296 = por %p294, %p295
      %p297 = scmp.ne.s32.totalorder %s289, %s291
      %p298 = scmp.eq.s32.totalorder %s29, 1
      %p299 = por %p297, %p298
      %p300 = scmp.ne.s32.totalorder %s291, %s292
      %p301 = scmp.eq.s32.totalorder %s29, 0
      %p302 = por %p300, %p301
      %p303 = scmp.ne.s32.totalorder %s291, %s292
      %p304 = scmp.eq.s32.totalorder %s30, 1
      %p305 = por %p303, %p304
      %p307 = scmp.ne.s32.totalorder %s292, %s306
      %p308 = scmp.eq.s32.totalorder %s30, 0
      %p309 = por %p307, %p308
      %s310 = ssub.s32 %s24, %s31
      %p311 = scmp.eq.s32.totalorder %s310, 0
      %s313 = sadd.s32 %s312, 1
      %s314 = scalar_select %p311, %s312, %s313
      %p317 = pneg %p311
      %p318 = scmp.eq.s32.totalorder %s24, 1
      %p319 = por %p317, %p318
      %p320 = scmp.ne.s32.totalorder %s312, %s315
      %p321 = scmp.eq.s32.totalorder %s24, 0
      %p322 = por %p320, %p321
      %p323 = scmp.ne.s32.totalorder %s312, %s315
      %p324 = scmp.eq.s32.totalorder %s29, 1
      %p325 = por %p323, %p324
      %p326 = scmp.ne.s32.totalorder %s315, %s316
      %p327 = scmp.eq.s32.totalorder %s29, 0
      %p328 = por %p326, %p327
      %p329 = scmp.ne.s32.totalorder %s315, %s316
      %p330 = scmp.eq.s32.totalorder %s30, 1
      %p331 = por %p329, %p330
      %p333 = scmp.ne.s32.totalorder %s316, %s332
      %p334 = scmp.eq.s32.totalorder %s30, 0
      %p335 = por %p333, %p334
      %p336 = scmp.le.s32.totalorder 1, %s24
      %p337 = scmp.lt.s32.totalorder %s24, 3
      %p338 = pnand %p336, %p337
      %p339 = pneg %p338
      // Predicated region
      $region9: #{tpu_custom_call.1} parent=5 // pred_check
        _
      $region10: #{tpu_custom_call.1} parent=5 // pred_check_branch
        %341 = sbr.rel (%p338) target = $region12
      $region11: #{tpu_custom_call.1} parent=5 // pred_region
        %s342 = ssub.s32 %s24, 1
        // Predicated region
        $region13: #{tpu_custom_call.1} parent=11 // pred_check
          %p343 = pneg %p71
        $region14: #{tpu_custom_call.1} parent=11 // pred_check_branch
          %345 = sbr.rel (%p343) target = $region16
        $region15: #{tpu_custom_call.1} parent=11 // pred_region
          _
        $region16: #{tpu_custom_call.1} parent=11 // pred_fallthru
          _
        // Predicated region
        $region17: #{tpu_custom_call.1} parent=11 // pred_check
          %p346 = pneg %p92
        $region18: #{tpu_custom_call.1} parent=11 // pred_check_branch
          %348 = sbr.rel (%p346) target = $region20
        $region19: #{tpu_custom_call.1} parent=11 // pred_region
          _
        $region20: #{tpu_custom_call.1} parent=11 // pred_fallthru
          _
        // Predicated region
        $region21: #{tpu_custom_call.1} parent=11 // pred_check
          %p349 = pneg %p113
        $region22: #{tpu_custom_call.1} parent=11 // pred_check_branch
          %351 = sbr.rel (%p349) target = $region24
        $region23: #{tpu_custom_call.1} parent=11 // pred_region
          _
        $region24: #{tpu_custom_call.1} parent=11 // pred_fallthru
          _
        // Predicated region
        $region25: #{tpu_custom_call.1} parent=11 // pred_check
          %p352 = pneg %p134
        $region26: #{tpu_custom_call.1} parent=11 // pred_check_branch
          %354 = sbr.rel (%p352) target = $region28
        $region27: #{tpu_custom_call.1} parent=11 // pred_region
          _
        $region28: #{tpu_custom_call.1} parent=11 // pred_fallthru
          _
        // Predicated region
        $region29: #{tpu_custom_call.1} parent=11 // pred_check
          %p355 = pneg %p155
        $region30: #{tpu_custom_call.1} parent=11 // pred_check_branch
          %357 = sbr.rel (%p355) target = $region32
        $region31: #{tpu_custom_call.1} parent=11 // pred_region
          _
        $region32: #{tpu_custom_call.1} parent=11 // pred_fallthru
          _
        // Predicated region
        $region33: #{tpu_custom_call.1} parent=11 // pred_check
          %p358 = pneg %p176
        $region34: #{tpu_custom_call.1} parent=11 // pred_check_branch
          %360 = sbr.rel (%p358) target = $region36
        $region35: #{tpu_custom_call.1} parent=11 // pred_region
          _
        $region36: #{tpu_custom_call.1} parent=11 // pred_fallthru
          _
        // Predicated region
        $region37: #{tpu_custom_call.1} parent=11 // pred_check
          %p361 = pneg %p197
        $region38: #{tpu_custom_call.1} parent=11 // pred_check_branch
          %363 = sbr.rel (%p361) target = $region40
        $region39: #{tpu_custom_call.1} parent=11 // pred_region
          _
        $region40: #{tpu_custom_call.1} parent=11 // pred_fallthru
          _
        // Predicated region
        $region41: #{tpu_custom_call.1} parent=11 // pred_check
          %p364 = pneg %p218
        $region42: #{tpu_custom_call.1} parent=11 // pred_check_branch
          %366 = sbr.rel (%p364) target = $region44
        $region43: #{tpu_custom_call.1} parent=11 // pred_region
          _
        $region44: #{tpu_custom_call.1} parent=11 // pred_fallthru
          _
        // Predicated region
        $region45: #{tpu_custom_call.1} parent=11 // pred_check
          %p367 = pneg %p239
        $region46: #{tpu_custom_call.1} parent=11 // pred_check_branch
          %369 = sbr.rel (%p367) target = $region48
        $region47: #{tpu_custom_call.1} parent=11 // pred_region
          _
        $region48: #{tpu_custom_call.1} parent=11 // pred_fallthru
          _
        // Predicated region
        $region49: #{tpu_custom_call.1} parent=11 // pred_check
          %p370 = pneg %p260
        $region50: #{tpu_custom_call.1} parent=11 // pred_check_branch
          %372 = sbr.rel (%p370) target = $region52
        $region51: #{tpu_custom_call.1} parent=11 // pred_region
          %s374 = ssub.s32 256, 256
          %375 = vsyncadd [#allocation4], %s374
          %s376 = sshll.u32 [#allocation3], 4
          %s377 = int_to_ptr.vmem [resolvable:$true] %s376
          %382 = dma.hbm_to_vmem [thread:$0]  %s10, 256, %s377, [#allocation4], 128, 128, 8
        $region52: #{tpu_custom_call.1} parent=11 // pred_fallthru
          _
        // Predicated region
        $region53: #{tpu_custom_call.1} parent=11 // pred_check
          %p383 = pneg %p281
        $region54: #{tpu_custom_call.1} parent=11 // pred_check_branch
          %385 = sbr.rel (%p383) target = $region56
        $region55: #{tpu_custom_call.1} parent=11 // pred_region
          _
        $region56: #{tpu_custom_call.1} parent=11 // pred_fallthru
          _
        // Predicated region
        $region57: #{tpu_custom_call.1} parent=11 // pred_check
          %p386 = pneg %p302
        $region58: #{tpu_custom_call.1} parent=11 // pred_check_branch
          %388 = sbr.rel (%p386) target = $region60
        $region59: #{tpu_custom_call.1} parent=11 // pred_region
          _
        $region60: #{tpu_custom_call.1} parent=11 // pred_fallthru
          _
      $region12: #{tpu_custom_call.1} parent=5 // pred_fallthru
        _
      %p389 = scmp.lt.s32.totalorder %s24, 2
      // Predicated region
      $region61: #{tpu_custom_call.1} parent=5 // pred_check
        %p390 = pneg %p389
      $region62: #{tpu_custom_call.1} parent=5 // pred_check_branch
        %392 = sbr.rel (%p390) target = $region64
      $region63: #{tpu_custom_call.1} parent=5 // pred_region
        // Predicated region
        $region65: #{tpu_custom_call.1} parent=63 // pred_check
          %p393 = pneg %p44
        $region66: #{tpu_custom_call.1} parent=63 // pred_check_branch
          %395 = sbr.rel (%p393) target = $region68
        $region67: #{tpu_custom_call.1} parent=63 // pred_region
          %p396 = scmp.lt.s32.totalorder %s24, 1
          %s397 = scalar_select %p396, %s24, 1
          %s398 = smul.addr %s397, 2
          %s399 = smul.addr %s398, 8
          %s400 = scalar_lea.vmem %s0, %s399
        $region68: #{tpu_custom_call.1} parent=63 // pred_fallthru
          _
      $region64: #{tpu_custom_call.1} parent=5 // pred_fallthru
        _
      %p401 = scmp.le.s32.totalorder 1, %s24
      %p402 = scmp.lt.s32.totalorder %s24, 3
      %p403 = pnand %p401, %p402
      %p404 = pneg %p403
      // Predicated region
      $region69: #{tpu_custom_call.1} parent=5 // pred_check
        _
      $region70: #{tpu_custom_call.1} parent=5 // pred_check_branch
        %406 = sbr.rel (%p403) target = $region72
      $region71: #{tpu_custom_call.1} parent=5 // pred_region
        %s407 = ssub.s32 %s24, 1
        // Predicated region
        $region73: #{tpu_custom_call.1} parent=71 // pred_check
          %p408 = pneg %p260
        $region74: #{tpu_custom_call.1} parent=71 // pred_check_branch
          %410 = sbr.rel (%p408) target = $region76
        $region75: #{tpu_custom_call.1} parent=71 // pred_region
          %411 = dma.done [#allocation4], 256
        $region76: #{tpu_custom_call.1} parent=71 // pred_fallthru
          _
        %p412 = scmp.lt.s32.totalorder %s29, 1
        %s413 = scalar_select %p412, %s29, 1
        %s414 = smul.addr %s413, 2
        %s415 = smul.addr %s414, 8
        %s416 = scalar_lea.vmem %s0, %s415
        %p417 = pneg %p50
        %p418 = pneg %p47
        %p419 = pneg %p71
        %p420 = pneg %p68
        %p421 = pneg %p92
        %p422 = pneg %p89
        %p423 = pneg %p113
        %p424 = pneg %p110
        %p425 = pneg %p134
        %p426 = pneg %p131
        %p427 = pneg %p155
        %p428 = pneg %p152
        %p429 = pneg %p176
        %p430 = pneg %p173
        %p431 = pneg %p197
        %p432 = pneg %p194
        %p433 = pneg %p218
        %p434 = pneg %p215
        %p435 = pneg %p239
        %p436 = pneg %p236
        %p437 = pneg %p260
        %p438 = pneg %p257
        %p439 = pneg %p281
        %p440 = pneg %p278
        %p441 = pneg %p302
        %p442 = pneg %p299
        %p443 = pneg %p328
        %p444 = pneg %p325
        %s445 = sand.u32 %s315, 1
        %s446 = scalar_lea.sflag [#allocation5], %s445
        %s447 = sand.u32 %s315, 1
        %s448 = smul.addr %s447, 16
        %s449 = scalar_lea.vmem [#allocation6], %s448
        %p450 = scmp.lt.s32.totalorder %s29, 1
        %s451 = scalar_select %p450, %s29, 1
        %s452 = smul.addr %s451, 2
        %s453 = smul.addr %s452, 8
        %s454 = scalar_lea.vmem %s0, %s453
        %v455 = vld [vmem:[%s454] sm:$0xff]
        %v456 = vld [vmem:[%s454 + $0x8] sm:$0xff]
        %v457 = vld [vmem:[%s1] sm:$0xff]
        %v458 = vld [vmem:[%s1 + $0x8] sm:$0xff]
        %v459 = vld [vmem:[%s2] sm:$0xff]
        %v460 = vld [vmem:[%s2 + $0x8] sm:$0xff]
        %v461 = vld [vmem:[%s3] sm:$0xff]
        %v462 = vld [vmem:[%s3 + $0x8] sm:$0xff]
        %v463 = vld [vmem:[%s4] sm:$0xff]
        %v464 = vld [vmem:[%s4 + $0x8] sm:$0xff]
        %v465 = vld [vmem:[%s5] sm:$0xff]
        %v466 = vld [vmem:[%s5 + $0x8] sm:$0xff]
        %v467 = vld [vmem:[%s6] sm:$0xff]
        %v468 = vld [vmem:[%s6 + $0x8] sm:$0xff]
        %v469 = vld [vmem:[%s7] sm:$0xff]
        %v470 = vld [vmem:[%s7 + $0x8] sm:$0xff]
        %s471 = sld [smem:[#allocation2]]
        %v472 = vld [vmem:[%s9] sm:$0xff]
        %v473 = vld [vmem:[%s9 + $0x8] sm:$0xff]
        %v474 = vld [vmem:[#allocation3] sm:$0xff]
        %v475 = vld [vmem:[#allocation3 + $0x8] sm:$0xff]
        %v476 = vld [vmem:[%s11] sm:$0xff]
        %v477 = vld [vmem:[%s12] sm:$0xff]
        %v478 = vlaneseq
        %v479 = vand.u32 %v478, 127
        %v480 = vadd.s32 %v479, 128
        %vm481 = vcmp.lt.s32.totalorder %v479, 0
        %v482 = vsub.s32 0, %v479
        %v483 = vsel %vm481, %v482, %v479
        %v484 = vshrl.u32 %v483, 7
        %v485 = vand.u32 %v483, 127
        %v486 = vsub.s32 0, %v485
        %v487 = vsel %vm481, %v486, %v485
        %vm488 = vcmp.lt.s32.totalorder %v480, 0
        %v489 = vsub.s32 0, %v480
        %v490 = vsel %vm488, %v489, %v480
        %v491 = vshrl.u32 %v490, 7
        %v492 = vand.u32 %v490, 127
        %v493 = vsub.s32 0, %v492
        %v494 = vsel %vm488, %v493, %v492
        %vm495 = vcmp.ne.s32.totalorder %v487, 0
        %vm496 = vcmp.ne.s32.totalorder %v494, 0
        %vm497 = vcmp.lt.s32.totalorder %v487, 0
        %vm498 = vcmp.lt.s32.totalorder %v494, 0
        %vm499 = vmand %vm497, %vm495
        %vm500 = vmand %vm498, %vm496
        %v501 = vadd.s32 %v487, 128
        %v502 = vadd.s32 %v494, 128
        %v503 = vsel %vm499, %v501, %v487
        %v504 = vsel %vm500, %v502, %v494
        %vm505 = vcmp.ge.s32.totalorder %v503, 2
        %vm506 = vcmp.ge.s32.totalorder %v504, 2
        %vm507 = vcmp.lt.s32.totalorder %v503, 126
        %vm508 = vcmp.lt.s32.totalorder %v504, 126
        %510 = vset.pattern.permute.xlu0 0
        %511 = vperm.xlu0 %510, %v459
        %v512 = vpop.permute.xlu0 %511
        %515 = vset.pattern.permute.xlu0 0
        %516 = vperm.xlu0 %515, %v460
        %v517 = vpop.permute.xlu0 %516
        %vm519 = vcmask 64512
        %v521 = vsel %vm519, %v457, 0
        %v524 = vsel %vm519, %v458, 0
        %526 = vmatprep.subr.mxu0 0.0
        %527 = vmatpush1.msra.mxu0 0.0
        %528 = vmatprep.subr.mxu0 0.0
        %529 = vmatpush1.msra.mxu0 0.0
        %530 = vmatprep.subr.mxu0 0.0
        %531 = vmatpush1.msra.mxu0 0.0
        %532 = vmatprep.subr.mxu0 0.0
        %533 = vmatpush1.msra.mxu0 0.0
        %534 = vmatprep.subr.mxu0 0.0
        %535 = vmatpush1.msra.mxu0 0.0
        %536 = vmatprep.subr.mxu0 0.0
        %537 = vmatpush1.msra.mxu0 0.0
        %538 = vmatprep.subr.mxu0 0.0
        %539 = vmatpush1.msra.mxu0 0.0
        %540 = vmatprep.subr.mxu0 0.0
        %541 = vmatpush1.msra.mxu0 0.0
        %542 = vmatprep.subr.mxu0 0.0
        %543 = vmatpush1.msra.mxu0 0.0
        %544 = vmatprep.subr.mxu0 0.0
        %545 = vmatpush1.msra.mxu0 0.0
        %546 = vmatprep.subr.mxu0 0.0
        %547 = vmatpush1.msra.mxu0 0.0
        %548 = vmatprep.subr.mxu0 0.0
        %549 = vmatpush1.msra.mxu0 0.0
        %550 = vmatprep.subr.mxu0 0.0
        %551 = vmatpush1.msra.mxu0 0.0
        %552 = vmatprep.subr.mxu0 0.0
        %553 = vmatpush1.msra.mxu0 0.0
        %554 = vmatprep.subr.mxu0 0.0
        %555 = vmatpush1.msra.mxu0 0.0
        %556 = vmatprep.subr.mxu0 %v456
        %557 = vmatpush1.msra.mxu0 %v455
        %558 = vmatprep.subr.mxu0 0.0
        %559 = vmatpush2.msra.mxu0 0.0
        %560 = vmatprep.subr.mxu0 0.0
        %561 = vmatpush2.msra.mxu0 0.0
        %562 = vmatprep.subr.mxu0 0.0
        %563 = vmatpush2.msra.mxu0 0.0
        %564 = vmatprep.subr.mxu0 0.0
        %565 = vmatpush2.msra.mxu0 0.0
        %566 = vmatprep.subr.mxu0 0.0
        %567 = vmatpush2.msra.mxu0 0.0
        %568 = vmatprep.subr.mxu0 0.0
        %569 = vmatpush2.msra.mxu0 0.0
        %570 = vmatprep.subr.mxu0 0.0
        %571 = vmatpush2.msra.mxu0 0.0
        %572 = vmatprep.subr.mxu0 0.0
        %573 = vmatpush2.msra.mxu0 0.0
        %574 = vmatprep.subr.mxu0 0.0
        %575 = vmatpush2.msra.mxu0 0.0
        %576 = vmatprep.subr.mxu0 0.0
        %577 = vmatpush2.msra.mxu0 0.0
        %578 = vmatprep.subr.mxu0 0.0
        %579 = vmatpush2.msra.mxu0 0.0
        %580 = vmatprep.subr.mxu0 0.0
        %581 = vmatpush2.msra.mxu0 0.0
        %582 = vmatprep.subr.mxu0 0.0
        %583 = vmatpush2.msra.mxu0 0.0
        %584 = vmatprep.subr.mxu0 0.0
        %585 = vmatpush2.msra.mxu0 0.0
        %586 = vmatprep.subr.mxu0 0.0
        %587 = vmatpush2.msra.mxu0 0.0
        %588 = vmatprep.subr.mxu0 0.0
        %589 = vmatpush2.msra.mxu0 0.0
        %590 = vmatprep.mubr.f32.mxu0 0.0
        %591 = vmatmul.mubr.f32.gmra.mxu0 %v521
        %v592 = vpop.f32.mrf.mxu0
        %v593 = vadd.f32 %v512, %v592
        %v594 = vpop.f32.mrf.mxu0
        %v595 = vadd.f32 %v512, %v594
        %596 = vmatprep.mubr.f32.mxu0 0.0
        %597 = vmatmul.mubr.f32.gmra.mxu0 %v524
        %v598 = vpop.f32.mrf.mxu0
        %v599 = vadd.f32 %v517, %v598
        %v600 = vpop.f32.mrf.mxu0
        %v601 = vadd.f32 %v517, %v600
        %602 = vdwg.mxu0
        %vm603 = vcmp.gt.f32.partialorder %v593, 0.0
        %vm604 = vcmp.gt.f32.partialorder %v595, 0.0
        %vm605 = vcmp.gt.f32.partialorder %v599, 0.0
        %vm606 = vcmp.gt.f32.partialorder %v601, 0.0
        %608 = vset.pattern.permute.xlu0 0
        %609 = vperm.xlu0 %608, %v461
        %v610 = vpop.permute.xlu0 %609
        %613 = vset.pattern.permute.xlu0 0
        %614 = vperm.xlu0 %613, %v462
        %v615 = vpop.permute.xlu0 %614
        %v617 = vmul.f32 %v610, %v593
        %v618 = vmul.f32 %v610, %v595
        %v619 = vmul.f32 %v615, %v599
        %v620 = vmul.f32 %v615, %v601
        %v621 = vsel %vm603, %v593, %v617
        %v622 = vsel %vm604, %v595, %v618
        %v623 = vsel %vm605, %v599, %v619
        %v624 = vsel %vm606, %v601, %v620
        %v625 = vadd.f32 %v621, %v623
        %626 = vadd.xlane.f32.xlu0 %v625
        %v627 = vpop.xlane.xlu0 %626
        %v628 = vrot.slane %v627, 4
        %v629 = vadd.f32 %v627, %v628
        %v630 = vrot.slane %v629, 2
        %v631 = vadd.f32 %v629, %v630
        %v632 = vrot.slane %v631, 1
        %v633 = vadd.f32 %v631, %v632
        %s634 = vtos %v633
        %v635 = vrcp.pop 2048.0
        %s636 = vtos %v635
        %s637 = smul.f32 %s634, %s636
        %v638 = vstv %s637
        %v639 = vsub.f32 %v621, %v638
        %v640 = vsub.f32 %v623, %v638
        %v641 = vmul.f32 %v639, %v639
        %v642 = vmul.f32 %v640, %v640
        %v643 = vadd.f32 %v641, %v642
        %644 = vadd.xlane.f32.xlu0 %v643
        %v645 = vpop.xlane.xlu0 %644
        %v646 = vrot.slane %v645, 4
        %v647 = vadd.f32 %v645, %v646
        %v648 = vrot.slane %v647, 2
        %v649 = vadd.f32 %v647, %v648
        %v650 = vrot.slane %v649, 1
        %v651 = vadd.f32 %v649, %v650
        %s652 = vtos %v651
        %v653 = vrcp.pop 2048.0
        %s654 = vtos %v653
        %s655 = smul.f32 %s652, %s654
        %s656 = sadd.f32 %s655, 1e-05
        %v657 = vstv %s656
        %v658 = vrsqrt.pop %v657
        %s659 = vtos %v658
        %v660 = vstv %s659
        %v661 = vmul.f32 %v639, %v660
        %v662 = vmul.f32 %v640, %v660
        %v663 = vmul.f32 %v661, %v463
        %v664 = vmul.f32 %v662, %v464
        %v665 = vadd.f32 %v663, %v465
        %v666 = vadd.f32 %v664, %v466
        %v667 = vadd.f32 %v622, %v624
        %668 = vadd.xlane.f32.xlu0 %v667
        %v669 = vpop.xlane.xlu0 %668
        %v670 = vrot.slane %v669, 4
        %v671 = vadd.f32 %v669, %v670
        %v672 = vrot.slane %v671, 2
        %v673 = vadd.f32 %v671, %v672
        %v674 = vrot.slane %v673, 1
        %v675 = vadd.f32 %v673, %v674
        %s676 = vtos %v675
        %v677 = vrcp.pop 2048.0
        %s678 = vtos %v677
        %s679 = smul.f32 %s676, %s678
        %v680 = vstv %s679
        %v681 = vsub.f32 %v622, %v680
        %v682 = vsub.f32 %v624, %v680
        %v683 = vmul.f32 %v681, %v681
        %v684 = vmul.f32 %v682, %v682
        %v685 = vadd.f32 %v683, %v684
        %686 = vadd.xlane.f32.xlu0 %v685
        %v687 = vpop.xlane.xlu0 %686
        %v688 = vrot.slane %v687, 4
        %v689 = vadd.f32 %v687, %v688
        %v690 = vrot.slane %v689, 2
        %v691 = vadd.f32 %v689, %v690
        %v692 = vrot.slane %v691, 1
        %v693 = vadd.f32 %v691, %v692
        %s694 = vtos %v693
        %v695 = vrcp.pop 2048.0
        %s696 = vtos %v695
        %s697 = smul.f32 %s694, %s696
        %s698 = sadd.f32 %s697, 1e-05
        %v699 = vstv %s698
        %v700 = vrsqrt.pop %v699
        %s701 = vtos %v700
        %v702 = vstv %s701
        %v703 = vmul.f32 %v681, %v702
        %v704 = vmul.f32 %v682, %v702
        %v705 = vmul.f32 %v703, %v463
        %v706 = vmul.f32 %v704, %v464
        %v707 = vadd.f32 %v705, %v465
        %v708 = vadd.f32 %v706, %v466
        %709 = vrot.lane.b32.xlu0 %v665, 2
        %v710 = vpop.permute.xlu0 %709
        %711 = vrot.lane.b32.xlu0 %v666, 2
        %v712 = vpop.permute.xlu0 %711
        %713 = vrot.lane.b32.xlu0 %v707, 2
        %v714 = vpop.permute.xlu0 %713
        %715 = vrot.lane.b32.xlu0 %v708, 2
        %v716 = vpop.permute.xlu0 %715
        %vm717 = vcmp.lt.s32.totalorder %v479, 2
        %v718 = vsel %vm717, %v710, %v714
        %v719 = vsel %vm717, %v712, %v716
        %v720 = vsel %vm717, %v714, %v710
        %v721 = vsel %vm717, %v716, %v712
        %v722 = vsel %vm505, 1, 0
        %v723 = vsel %vm506, 1, 0
        %vm724 = vcmp.eq.s32.totalorder %v722, 1
        %vm725 = vcmp.eq.s32.totalorder %v723, 1
        %v726 = vsel %vm724, %v720, 0.0
        %v727 = vsel %vm725, %v718, 0.0
        %v728 = vsel %vm724, %v721, 0.0
        %v729 = vsel %vm725, %v719, 0.0
        %730 = vrot.lane.b32.xlu0 %v665, 126
        %v731 = vpop.permute.xlu0 %730
        %732 = vrot.lane.b32.xlu0 %v666, 126
        %v733 = vpop.permute.xlu0 %732
        %734 = vrot.lane.b32.xlu0 %v707, 126
        %v735 = vpop.permute.xlu0 %734
        %736 = vrot.lane.b32.xlu0 %v708, 126
        %v737 = vpop.permute.xlu0 %736
        %vm738 = vcmp.lt.s32.totalorder %v479, 126
        %v739 = vsel %vm738, %v731, %v735
        %v740 = vsel %vm738, %v733, %v737
        %v741 = vsel %vm738, %v735, %v731
        %v742 = vsel %vm738, %v737, %v733
        %v743 = vsel %vm507, 1, 0
        %v744 = vsel %vm508, 1, 0
        %vm745 = vcmp.eq.s32.totalorder %v743, 1
        %vm746 = vcmp.eq.s32.totalorder %v744, 1
        %v747 = vsel %vm745, %v739, 0.0
        %v748 = vsel %vm746, %v741, 0.0
        %v749 = vsel %vm745, %v740, 0.0
        %v750 = vsel %vm746, %v742, 0.0
        %752 = vset.pattern.permute.xlu0 0
        %753 = vperm.xlu0 %752, %v469
        %v754 = vpop.permute.xlu0 %753
        %757 = vset.pattern.permute.xlu0 0
        %758 = vperm.xlu0 %757, %v470
        %v759 = vpop.permute.xlu0 %758
        %vm761 = vcmask 392192
        %v763 = vsel %vm761, %v467, 0
        %v766 = vsel %vm761, %v468, 0
        %768 = vmatprep.subr.mxu0 0.0
        %769 = vmatpush1.msra.mxu0 0.0
        %770 = vmatprep.subr.mxu0 0.0
        %771 = vmatpush1.msra.mxu0 0.0
        %772 = vmatprep.subr.mxu0 0.0
        %773 = vmatpush1.msra.mxu0 0.0
        %774 = vmatprep.subr.mxu0 0.0
        %775 = vmatpush1.msra.mxu0 0.0
        %776 = vmatprep.subr.mxu0 0.0
        %777 = vmatpush1.msra.mxu0 0.0
        %778 = vmatprep.subr.mxu0 0.0
        %779 = vmatpush1.msra.mxu0 0.0
        %780 = vmatprep.subr.mxu0 0.0
        %781 = vmatpush1.msra.mxu0 0.0
        %782 = vmatprep.subr.mxu0 0.0
        %783 = vmatpush1.msra.mxu0 0.0
        %784 = vmatprep.subr.mxu0 0.0
        %785 = vmatpush1.msra.mxu0 0.0
        %786 = vmatprep.subr.mxu0 0.0
        %787 = vmatpush1.msra.mxu0 0.0
        %788 = vmatprep.subr.mxu0 %v750
        %789 = vmatpush1.msra.mxu0 %v749
        %790 = vmatprep.subr.mxu0 %v748
        %791 = vmatpush1.msra.mxu0 %v747
        %792 = vmatprep.subr.mxu0 %v708
        %793 = vmatpush1.msra.mxu0 %v666
        %794 = vmatprep.subr.mxu0 %v707
        %795 = vmatpush1.msra.mxu0 %v665
        %796 = vmatprep.subr.mxu0 %v729
        %797 = vmatpush1.msra.mxu0 %v728
        %798 = vmatprep.subr.mxu0 %v727
        %799 = vmatpush1.msra.mxu0 %v726
        %800 = vmatprep.subr.mxu0 0.0
        %801 = vmatpush2.msra.mxu0 0.0
        %802 = vmatprep.subr.mxu0 0.0
        %803 = vmatpush2.msra.mxu0 0.0
        %804 = vmatprep.subr.mxu0 0.0
        %805 = vmatpush2.msra.mxu0 0.0
        %806 = vmatprep.subr.mxu0 0.0
        %807 = vmatpush2.msra.mxu0 0.0
        %808 = vmatprep.subr.mxu0 0.0
        %809 = vmatpush2.msra.mxu0 0.0
        %810 = vmatprep.subr.mxu0 0.0
        %811 = vmatpush2.msra.mxu0 0.0
        %812 = vmatprep.subr.mxu0 0.0
        %813 = vmatpush2.msra.mxu0 0.0
        %814 = vmatprep.subr.mxu0 0.0
        %815 = vmatpush2.msra.mxu0 0.0
        %816 = vmatprep.subr.mxu0 0.0
        %817 = vmatpush2.msra.mxu0 0.0
        %818 = vmatprep.subr.mxu0 0.0
        %819 = vmatpush2.msra.mxu0 0.0
        %820 = vmatprep.subr.mxu0 0.0
        %821 = vmatpush2.msra.mxu0 0.0
        %822 = vmatprep.subr.mxu0 0.0
        %823 = vmatpush2.msra.mxu0 0.0
        %824 = vmatprep.subr.mxu0 0.0
        %825 = vmatpush2.msra.mxu0 0.0
        %826 = vmatprep.subr.mxu0 0.0
        %827 = vmatpush2.msra.mxu0 0.0
        %828 = vmatprep.subr.mxu0 0.0
        %829 = vmatpush2.msra.mxu0 0.0
        %830 = vmatprep.subr.mxu0 0.0
        %831 = vmatpush2.msra.mxu0 0.0
        %832 = vmatprep.mubr.f32.mxu0 0.0
        %833 = vmatmul.mubr.f32.gmra.mxu0 %v763
        %v834 = vpop.f32.mrf.mxu0
        %v835 = vadd.f32 %v754, %v834
        %v836 = vpop.f32.mrf.mxu0
        %v837 = vadd.f32 %v754, %v836
        %838 = vmatprep.mubr.f32.mxu0 0.0
        %839 = vmatmul.mubr.f32.gmra.mxu0 %v766
        %v840 = vpop.f32.mrf.mxu0
        %v841 = vadd.f32 %v759, %v840
        %v842 = vpop.f32.mrf.mxu0
        %v843 = vadd.f32 %v759, %v842
        %844 = vdwg.mxu0
        %vm845 = vcmp.gt.f32.partialorder %v835, 0.0
        %vm846 = vcmp.gt.f32.partialorder %v837, 0.0
        %vm847 = vcmp.gt.f32.partialorder %v841, 0.0
        %vm848 = vcmp.gt.f32.partialorder %v843, 0.0
        %v849 = vstv %s471
        %v850 = vmul.f32 %v849, %v835
        %v851 = vmul.f32 %v849, %v837
        %v852 = vmul.f32 %v849, %v841
        %v853 = vmul.f32 %v849, %v843
        %v854 = vsel %vm845, %v835, %v850
        %v855 = vsel %vm846, %v837, %v851
        %v856 = vsel %vm847, %v841, %v852
        %v857 = vsel %vm848, %v843, %v853
        %v858 = vadd.f32 %v854, %v856
        %859 = vadd.xlane.f32.xlu0 %v858
        %v860 = vpop.xlane.xlu0 %859
        %v861 = vrot.slane %v860, 4
        %v862 = vadd.f32 %v860, %v861
        %v863 = vrot.slane %v862, 2
        %v864 = vadd.f32 %v862, %v863
        %v865 = vrot.slane %v864, 1
        %v866 = vadd.f32 %v864, %v865
        %s867 = vtos %v866
        %v868 = vrcp.pop 2048.0
        %s869 = vtos %v868
        %s870 = smul.f32 %s867, %s869
        %v871 = vstv %s870
        %v872 = vsub.f32 %v854, %v871
        %v873 = vsub.f32 %v856, %v871
        %v874 = vmul.f32 %v872, %v872
        %v875 = vmul.f32 %v873, %v873
        %v876 = vadd.f32 %v874, %v875
        %877 = vadd.xlane.f32.xlu0 %v876
        %v878 = vpop.xlane.xlu0 %877
        %v879 = vrot.slane %v878, 4
        %v880 = vadd.f32 %v878, %v879
        %v881 = vrot.slane %v880, 2
        %v882 = vadd.f32 %v880, %v881
        %v883 = vrot.slane %v882, 1
        %v884 = vadd.f32 %v882, %v883
        %s885 = vtos %v884
        %v886 = vrcp.pop 2048.0
        %s887 = vtos %v886
        %s888 = smul.f32 %s885, %s887
        %s889 = sadd.f32 %s888, 1e-05
        %v890 = vstv %s889
        %v891 = vrsqrt.pop %v890
        %s892 = vtos %v891
        %v893 = vstv %s892
        %v894 = vmul.f32 %v872, %v893
        %v895 = vmul.f32 %v873, %v893
        %v896 = vmul.f32 %v894, %v472
        %v897 = vmul.f32 %v895, %v473
        %v898 = vadd.f32 %v896, %v474
        %v899 = vadd.f32 %v897, %v475
        %v900 = vadd.f32 %v855, %v857
        %901 = vadd.xlane.f32.xlu0 %v900
        %v902 = vpop.xlane.xlu0 %901
        %v903 = vrot.slane %v902, 4
        %v904 = vadd.f32 %v902, %v903
        %v905 = vrot.slane %v904, 2
        %v906 = vadd.f32 %v904, %v905
        %v907 = vrot.slane %v906, 1
        %v908 = vadd.f32 %v906, %v907
        %s909 = vtos %v908
        %v910 = vrcp.pop 2048.0
        %s911 = vtos %v910
        %s912 = smul.f32 %s909, %s911
        %v913 = vstv %s912
        %v914 = vsub.f32 %v855, %v913
        %v915 = vsub.f32 %v857, %v913
        %v916 = vmul.f32 %v914, %v914
        %v917 = vmul.f32 %v915, %v915
        %v918 = vadd.f32 %v916, %v917
        %919 = vadd.xlane.f32.xlu0 %v918
        %v920 = vpop.xlane.xlu0 %919
        %v921 = vrot.slane %v920, 4
        %v922 = vadd.f32 %v920, %v921
        %v923 = vrot.slane %v922, 2
        %v924 = vadd.f32 %v922, %v923
        %v925 = vrot.slane %v924, 1
        %v926 = vadd.f32 %v924, %v925
        %s927 = vtos %v926
        %v928 = vrcp.pop 2048.0
        %s929 = vtos %v928
        %s930 = smul.f32 %s927, %s929
        %s931 = sadd.f32 %s930, 1e-05
        %v932 = vstv %s931
        %v933 = vrsqrt.pop %v932
        %s934 = vtos %v933
        %v935 = vstv %s934
        %v936 = vmul.f32 %v914, %v935
        %v937 = vmul.f32 %v915, %v935
        %v938 = vmul.f32 %v936, %v472
        %v939 = vmul.f32 %v937, %v473
        %v940 = vadd.f32 %v938, %v474
        %v941 = vadd.f32 %v939, %v475
        %943 = vset.pattern.permute.xlu0 0
        %944 = vperm.xlu0 %943, %v477
        %v945 = vpop.permute.xlu0 %944
        %vm947 = vcmask 130048
        %v949 = vsel %vm947, %v476, 0
        %951 = vmatprep.subr.mxu0 0.0
        %952 = vmatpush1.msra.mxu0 0.0
        %953 = vmatprep.subr.mxu0 0.0
        %954 = vmatpush1.msra.mxu0 0.0
        %955 = vmatprep.subr.mxu0 0.0
        %956 = vmatpush1.msra.mxu0 0.0
        %957 = vmatprep.subr.mxu0 0.0
        %958 = vmatpush1.msra.mxu0 0.0
        %959 = vmatprep.subr.mxu0 0.0
        %960 = vmatpush1.msra.mxu0 0.0
        %961 = vmatprep.subr.mxu0 0.0
        %962 = vmatpush1.msra.mxu0 0.0
        %963 = vmatprep.subr.mxu0 0.0
        %964 = vmatpush1.msra.mxu0 0.0
        %965 = vmatprep.subr.mxu0 0.0
        %966 = vmatpush1.msra.mxu0 0.0
        %967 = vmatprep.subr.mxu0 0.0
        %968 = vmatpush1.msra.mxu0 0.0
        %969 = vmatprep.subr.mxu0 0.0
        %970 = vmatpush1.msra.mxu0 0.0
        %971 = vmatprep.subr.mxu0 0.0
        %972 = vmatpush1.msra.mxu0 0.0
        %973 = vmatprep.subr.mxu0 0.0
        %974 = vmatpush1.msra.mxu0 0.0
        %975 = vmatprep.subr.mxu0 0.0
        %976 = vmatpush1.msra.mxu0 0.0
        %977 = vmatprep.subr.mxu0 0.0
        %978 = vmatpush1.msra.mxu0 0.0
        %979 = vmatprep.subr.mxu0 %v941
        %980 = vmatpush1.msra.mxu0 %v899
        %981 = vmatprep.subr.mxu0 %v940
        %982 = vmatpush1.msra.mxu0 %v898
        %983 = vmatprep.subr.mxu0 0.0
        %984 = vmatpush2.msra.mxu0 0.0
        %985 = vmatprep.subr.mxu0 0.0
        %986 = vmatpush2.msra.mxu0 0.0
        %987 = vmatprep.subr.mxu0 0.0
        %988 = vmatpush2.msra.mxu0 0.0
        %989 = vmatprep.subr.mxu0 0.0
        %990 = vmatpush2.msra.mxu0 0.0
        %991 = vmatprep.subr.mxu0 0.0
        %992 = vmatpush2.msra.mxu0 0.0
        %993 = vmatprep.subr.mxu0 0.0
        %994 = vmatpush2.msra.mxu0 0.0
        %995 = vmatprep.subr.mxu0 0.0
        %996 = vmatpush2.msra.mxu0 0.0
        %997 = vmatprep.subr.mxu0 0.0
        %998 = vmatpush2.msra.mxu0 0.0
        %999 = vmatprep.subr.mxu0 0.0
        %1000 = vmatpush2.msra.mxu0 0.0
        %1001 = vmatprep.subr.mxu0 0.0
        %1002 = vmatpush2.msra.mxu0 0.0
        %1003 = vmatprep.subr.mxu0 0.0
        %1004 = vmatpush2.msra.mxu0 0.0
        %1005 = vmatprep.subr.mxu0 0.0
        %1006 = vmatpush2.msra.mxu0 0.0
        %1007 = vmatprep.subr.mxu0 0.0
        %1008 = vmatpush2.msra.mxu0 0.0
        %1009 = vmatprep.subr.mxu0 0.0
        %1010 = vmatpush2.msra.mxu0 0.0
        %1011 = vmatprep.subr.mxu0 0.0
        %1012 = vmatpush2.msra.mxu0 0.0
        %1013 = vmatprep.subr.mxu0 0.0
        %1014 = vmatpush2.msra.mxu0 0.0
        %1015 = vmatprep.mubr.f32.mxu0 0.0
        %1016 = vmatmul.mubr.f32.gmra.mxu0 %v949
        %v1017 = vpop.f32.mrf.mxu0
        %v1018 = vadd.f32 %v945, %v1017
        %v1019 = vpop.f32.mrf.mxu0
        %v1020 = vadd.f32 %v945, %v1019
        %1021 = vdwg.mxu0
        %v1022 = vadd.f32 %v1018, %v455
        %v1023 = vadd.f32 %v1020, %v456
        %1024 = vst [vmem:[%s449] sm:$0xff] %v1022
        %1025 = vst [vmem:[%s449 + $0x8] sm:$0xff] %v1023
        %s1026 = sand.u32 %s315, 1
        %s1027 = scalar_lea.sflag [#allocation5], %s1026
        %s1028 = sand.u32 %s315, 1
        %s1029 = smul.addr %s1028, 16
        %s1030 = scalar_lea.vmem [#allocation6], %s1029
        // Predicated region
        $region77: #{tpu_custom_call.1} parent=71 // pred_check
          %p1031 = pneg %p325
        $region78: #{tpu_custom_call.1} parent=71 // pred_check_branch
          %1033 = sbr.rel (%p1031) target = $region80
        $region79: #{tpu_custom_call.1} parent=71 // pred_region
          %s1035 = ssub.s32 256, 256
          %1036 = vsyncadd %s1027, %s1035
          %s1037 = smul.addr %s29, 2
          %s1038 = smul.addr %s1037, 128
          %s1039 = scalar_lea.hbm %s13, %s1038
          %s1041 = sshll.u32 %s1030, 4
          %s1042 = int_to_ptr.vmem [resolvable:$true] %s1041
          %1044 = dma.vmem_to_hbm [thread:$0]  %s1042, 256, %s1039, %s1027
        $region80: #{tpu_custom_call.1} parent=71 // pred_fallthru
          _
      $region72: #{tpu_custom_call.1} parent=5 // pred_fallthru
        _
      %p1045 = scmp.le.s32.totalorder 2, %s24
      // Predicated region
      $region81: #{tpu_custom_call.1} parent=5 // pred_check
        %p1046 = pneg %p1045
      $region82: #{tpu_custom_call.1} parent=5 // pred_check_branch
        %1048 = sbr.rel (%p1046) target = $region84
      $region83: #{tpu_custom_call.1} parent=5 // pred_region
        %s1049 = ssub.s32 %s24, 2
        // Predicated region
        $region85: #{tpu_custom_call.1} parent=83 // pred_check
          %p1050 = pneg %p331
        $region86: #{tpu_custom_call.1} parent=83 // pred_check_branch
          %1052 = sbr.rel (%p1050) target = $region88
        $region87: #{tpu_custom_call.1} parent=83 // pred_region
          %s1053 = sand.u32 %s316, 1
          %s1054 = scalar_lea.sflag [#allocation5], %s1053
          %s1055 = sand.u32 %s316, 1
          %s1056 = smul.addr %s1055, 16
          %s1057 = scalar_lea.vmem [#allocation6], %s1056
          %1058 = dma.done %s1054, 256
        $region88: #{tpu_custom_call.1} parent=83 // pred_fallthru
          _
      $region84: #{tpu_custom_call.1} parent=5 // pred_fallthru
        _
    $region6: #{tpu_custom_call.1} parent=1 // loop_footer
      %s28 = sadd.s32 1, %s24
    $region7: #{tpu_custom_call.1} parent=1 // loop_footer_branch
      %23 = sbr.rel target = $region3
    $region8: #{tpu_custom_call.1} parent=1 // loop_exit
      _
    %1059 = vsyncpa [#allocation4], 1
    %s1060 = scalar_lea.sflag [#allocation4], 1
    %1061 = vsyncpa %s1060, 1
    %1062 = vsyncpa [#allocation5], 1
    %s1063 = scalar_lea.sflag [#allocation5], 1
    %1064 = vsyncpa %s1063, 1

</llo_original>
